<compile_context>
chip_gen: v5e
topology: v5e:2x2
jax: 0.10.0
libtpu: 0.0.40
codegen_flags: <defaults>
</compile_context>

<pallas_src>
import jax
import jax.numpy as jnp
from jax.experimental import pallas as pl
from jax.experimental.pallas import tpu as pltpu

# Keeps the tiny fp32 conv/RNN dots (and the pure-JAX reference) accurate;
# irrelevant for the bf16 head dots and for wall time (HBM-bound).
jax.config.update("jax_default_matmul_precision", "highest")

_TN = 1024                # N tile width: 4 ragged-tiled steps for N=3844
_VMEM_LIMIT = 48 << 20    # ~23.5 MB actually needed; fits all gens incl. v7x


# ------------------------- Pallas kernels -------------------------

def _heads_kernel(cflat_ref, rflat_ref, w1_ref, b1_ref, w2_ref, b2_ref, o_ref):
    """One N-tile of:  FT1 = conv_flat @ W1 + b1 ; FT2 = rnn_flat @ W2 + b2 ;
    FT = FT1 * FT2 ; out = FT / max(||FT||_2 over dim 0, 1e-12).

    Weights stream as bf16; activations are cast to bf16 in-kernel (tiny,
    M=2 rows); accumulation is fp32 on the MXU.
    """
    c = cflat_ref[...].astype(jnp.bfloat16)      # (M, K1)
    r = rflat_ref[...].astype(jnp.bfloat16)      # (M, K2)
    ft1 = (jnp.dot(c, w1_ref[...], preferred_element_type=jnp.float32)
           + b1_ref[...])
    ft2 = (jnp.dot(r, w2_ref[...], preferred_element_type=jnp.float32)
           + b2_ref[...])
    ft = ft1 * ft2
    norm = jnp.sqrt(jnp.sum(ft * ft, axis=0, keepdims=True))
    o_ref[...] = ft / jnp.maximum(norm, 1e-12)


def fused_heads_pallas(conv_flat, rnn_flat, w1_bf16, b1, w2_bf16, b2, *, tn=_TN):
    """Fused Linear(K1->N) & Linear(K2->N) + product + L2-normalize(dim=0).

    conv_flat: (M, K1) f32, rnn_flat: (M, K2) f32, w*: (K*, N) bf16,
    b*: (1, N) f32.  Returns (M, N) f32.  N is NOT padded: the last N tile is
    ragged (masked stores), so no dead weight columns are streamed from HBM.
    """
    M, K1 = conv_flat.shape
    M2, K2 = rnn_flat.shape
    N = w1_bf16.shape[1]
    assert M == M2 and w2_bf16.shape == (K2, N)
    grid_n = pl.cdiv(N, tn)
    return pl.pallas_call(
        _heads_kernel,
        out_shape=jax.ShapeDtypeStruct((M, N), jnp.float32),
        grid=(grid_n,),
        in_specs=[
            pl.BlockSpec((M, K1), lambda n: (0, 0)),    # full-K activations
            pl.BlockSpec((M, K2), lambda n: (0, 0)),
            pl.BlockSpec((K1, tn), lambda n: (0, n)),   # full-K weight columns
            pl.BlockSpec((1, tn), lambda n: (0, n)),
            pl.BlockSpec((K2, tn), lambda n: (0, n)),
            pl.BlockSpec((1, tn), lambda n: (0, n)),
        ],
        out_specs=pl.BlockSpec((M, tn), lambda n: (0, n)),
        compiler_params=pltpu.CompilerParams(
            dimension_semantics=("parallel",),          # shards tiles on v7x
            vmem_limit_bytes=_VMEM_LIMIT),
    )(conv_flat, rnn_flat, w1_bf16, b1, w2_bf16, b2)


def _conv_mm_kernel(cols_ref, w_ref, b_ref, o_ref):
    # cols: (B, Cin*Kw, Lout), w: (Cout, Cin*Kw), b: (Cout, 1) -> (B, Cout, Lout)
    o_ref[...] = (
        jnp.einsum("ok,bkl->bol", w_ref[...], cols_ref[...],
                   preferred_element_type=jnp.float32)
        + b_ref[...][None, :, :])


def conv1d_pallas(x, q):
    """nn.Conv1d(62, 62, 3, stride=2), VALID padding.  x: (B, Cin, L)."""
    B = x.shape[0]
    wmat = q["w_conv_mat"]                       # (Cout, Cin*Kw), prepared
    bcol = q["b_conv_col"]                       # (Cout, 1), prepared
    idx = q["conv_idx"]                          # (Kw, Lout), prepared
    Cout = wmat.shape[0]
    Lout = idx.shape[1]
    # im2col gather is layout glue; MACs run inside the Pallas kernel.
    cols = x[:, :, idx].reshape(B, wmat.shape[1], Lout)
    return pl.pallas_call(
        _conv_mm_kernel,
        out_shape=jax.ShapeDtypeStruct((B, Cout, Lout), jnp.float32),
    )(cols, wmat, bcol)


def _rnn_kernel(x_ref, wih0_ref, whh0_ref, b0_ref,
                wih1_ref, whh1_ref, b1_ref, o_ref):
    # x: (seq, rnn_batch, input); 2-layer tanh RNN, h0 = zeros (PyTorch default)
    seq, brnn, hid = o_ref.shape
    h0 = jnp.zeros((brnn, hid), jnp.float32)
    h1 = jnp.zeros((brnn, hid), jnp.float32)

    def step(xt, h0, h1):
        h0 = jnp.tanh(
            jnp.dot(xt, wih0_ref[...], preferred_element_type=jnp.float32)
            + jnp.dot(h0, whh0_ref[...], preferred_element_type=jnp.float32)
            + b0_ref[...])
        h1 = jnp.tanh(
            jnp.dot(h0, wih1_ref[...], preferred_element_type=jnp.float32)
            + jnp.dot(h1, whh1_ref[...], preferred_element_type=jnp.float32)
            + b1_ref[...])
        return h0, h1

    if seq <= 8:
        # Tiny static trip count: straight unroll (full LLO visibility).
        for t in range(seq):
            h0, h1 = step(x_ref[t], h0, h1)
            o_ref[t] = h1
    else:
        # Larger seq: bounded code size / live ranges via fori_loop.
        def body(t, carry):
            c0, c1 = carry
            c0, c1 = step(x_ref[t], c0, c1)
            o_ref[t] = c1
            return (c0, c1)
        jax.lax.fori_loop(0, seq, body, (h0, h1))


def rnn_pallas(x, q):
    seq, brnn, _ = x.shape
    hid = q["rnn_wih0T"].shape[1]
    return pl.pallas_call(
        _rnn_kernel,
        out_shape=jax.ShapeDtypeStruct((seq, brnn, hid), jnp.float32),
    )(x,
      q["rnn_wih0T"], q["rnn_whh0T"], q["rnn_b0"],
      q["rnn_wih1T"], q["rnn_whh1T"], q["rnn_b1"])


# ------------------------- MFCLM forward -------------------------

def mfclm_forward(x, q, *, tn=_TN):
    """q = prepare_params(init_params(...)): bf16 head weights + prepped glue."""
    B = x.shape[0]
    # encoder1: Conv1d(62, 62, 3, stride=2) -> flatten            -> (B, 1860)
    ft1_act = conv1d_pallas(x, q).reshape(B, -1)
    # encoder2: RNN(62, 62, 2) on x as (seq=B, 62, 62) -> flatten -> (B, 3844)
    ft2_act = rnn_pallas(x, q).reshape(B, -1)
    # Fused: Linear(1860,3844), Linear(3844,3844), FT1*FT2, F.normalize(dim=0)
    return fused_heads_pallas(ft1_act, ft2_act,
                              q["w1_bf16"], q["b1_row"],
                              q["w2_bf16"], q["b2_row"], tn=tn)
    # TODO(synk): InfoNCE() in the original forward is constructed but never
    # used (undefined symbol in the source file); intentionally omitted.


# ------------------------- params & preparation -------------------------

def init_params(key):
    C = 62
    Lout = (C - 3) // 2 + 1          # 30
    keys = jax.random.split(key, 14)

    def u(k, shape, fan):
        lim = 1.0 / jnp.sqrt(jnp.float32(fan))
        return jax.random.uniform(k, shape, jnp.float32, -lim, lim)

    p = {
        "w_conv": u(keys[0], (C, C, 3), C * 3),
        "b_conv": u(keys[1], (C,), C * 3),
        "w1": u(keys[10], (C * Lout, C * C), C * Lout),
        "b1": u(keys[11], (C * C,), C * Lout),
        "w2": u(keys[12], (C * C, C * C), C * C),
        "b2": u(keys[13], (C * C,), C * C),
    }
    for layer in range(2):
        p[f"wih{layer}"] = u(keys[2 + 4 * layer], (C, C), C)
        p[f"whh{layer}"] = u(keys[3 + 4 * layer], (C, C), C)
        p[f"bih{layer}"] = u(keys[4 + 4 * layer], (C,), C)
        p[f"bhh{layer}"] = u(keys[5 + 4 * layer], (C,), C)
    return p


def prepare_params(p):
    """One-time parameter prep (none of this runs per forward):
    bf16 head weights, conv im2col index / matricized weight, RNN transposes
    and fused biases.  No N padding anywhere (ragged last tile instead)."""
    C, Kw, stride = 62, 3, 2
    Lout = (C - Kw) // stride + 1
    q = dict(p)

    # Conv glue.
    q["conv_idx"] = (stride * jnp.arange(Lout)[None, :]
                     + jnp.arange(Kw)[:, None]).astype(jnp.int32)   # (Kw, Lout)
    q["w_conv_mat"] = p["w_conv"].reshape(C, C * Kw)
    q["b_conv_col"] = p["b_conv"].reshape(C, 1)

    # RNN glue.
    for layer in range(2):
        q[f"rnn_wih{layer}T"] = p[f"wih{layer}"].T
        q[f"rnn_whh{layer}T"] = p[f"whh{layer}"].T
        q[f"rnn_b{layer}"] = (p[f"bih{layer}"] + p[f"bhh{layer}"]).reshape(1, C)

    # Linear heads: stream weights as bf16 (fp32 MXU accumulation in-kernel).
    # Biases stay fp32 (negligible bytes).
    q["w1_bf16"] = p["w1"].astype(jnp.bfloat16)
    q["w2_bf16"] = p["w2"].astype(jnp.bfloat16)
    q["b1_row"] = p["b1"].reshape(1, -1)
    q["b2_row"] = p["b2"].reshape(1, -1)
    return q


# ------------------------- pure-JAX reference -------------------------

def mfclm_reference(x, p, *, head_weight_dtype=jnp.float32):
    """Pure-JAX reference of the forward.  With head_weight_dtype=bfloat16 it
    reproduces the deployed bf16 weight-streaming numerics (the only intended
    deviation from the exact fp32 module)."""
    B = x.shape[0]
    conv = jax.lax.conv_general_dilated(
        x, p["w_conv"], window_strides=(2,), padding="VALID",
        dimension_numbers=("NCH", "OIH", "NCH"))
    conv = conv + p["b_conv"][None, :, None]
    ft1_act = conv.reshape(B, -1)

    brnn = x.shape[1]
    hid = p["wih0"].shape[0]
    h0 = jnp.zeros((brnn, hid), jnp.float32)
    h1 = jnp.zeros((brnn, hid), jnp.float32)
    outs = []
    for t in range(B):
        h0 = jnp.tanh(x[t] @ p["wih0"].T + p["bih0"]
                      + h0 @ p["whh0"].T + p["bhh0"])
        h1 = jnp.tanh(h0 @ p["wih1"].T + p["bih1"]
                      + h1 @ p["whh1"].T + p["bhh1"])
        outs.append(h1)
    ft2_act = jnp.stack(outs).reshape(B, -1)

    if head_weight_dtype == jnp.bfloat16:
        ft1 = jnp.dot(ft1_act.astype(jnp.bfloat16), p["w1"].astype(jnp.bfloat16),
                      preferred_element_type=jnp.float32) + p["b1"]
        ft2 = jnp.dot(ft2_act.astype(jnp.bfloat16), p["w2"].astype(jnp.bfloat16),
                      preferred_element_type=jnp.float32) + p["b2"]
    else:
        ft1 = ft1_act @ p["w1"] + p["b1"]
        ft2 = ft2_act @ p["w2"] + p["b2"]

    ft = ft1 * ft2
    norm = jnp.sqrt(jnp.sum(ft * ft, axis=0, keepdims=True))
    return ft / jnp.maximum(norm, 1e-12)


if __name__ == "__main__":
    key = jax.random.PRNGKey(0)
    kx, kp = jax.random.split(key)

    # The module hard-codes 62 channels / 62-dim RNN input, so length must be
    # 62; batch kept small (B=2).
    B, C, L = 2, 62, 62
    x = jax.random.normal(kx, (B, C, L), jnp.float32)
    params = init_params(kp)
    prepared = prepare_params(params)      # one-time bf16 cast + glue prep

    out = jax.block_until_ready(mfclm_forward(x, prepared))
    assert out.shape == (B, C * C), out.shape          # (2, 3844)

    # Tight check against a reference that uses the same bf16-stored head
    # weights (validates every Pallas kernel).  Frobenius metric is used
    # because F.normalize(dim=0) over only 2 rows is ill-conditioned for
    # near-zero columns, making elementwise tolerances non-robust.
    ref_bf = jax.block_until_ready(
        mfclm_reference(x, params, head_weight_dtype=jnp.bfloat16))
    rel_bf = float(jnp.linalg.norm(out - ref_bf) / jnp.linalg.norm(ref_bf))
    assert rel_bf < 1e-2, rel_bf

    # Looser sanity check against the exact fp32 module semantics; deviation
    # stems only from the bf16 weight-streaming optimization (~0.5-2% rel,
    # amplified on near-zero columns by the dim-0 normalize).
    ref_f32 = jax.block_until_ready(mfclm_reference(x, params))
    rel_f32 = float(jnp.linalg.norm(out - ref_f32) / jnp.linalg.norm(ref_f32))
    assert rel_f32 < 1e-1, rel_f32

    print("KERNEL_OK")
</pallas_src>

<mosaic_0001>
module attributes {stable_mosaic.version = 11 : i64} {
  func.func @_conv_mm_kernel(%arg0: memref<2x186x30xf32, #tpu.memory_space<vmem>>, %arg1: memref<62x186xf32, #tpu.memory_space<vmem>>, %arg2: memref<62x1xf32, #tpu.memory_space<vmem>>, %arg3: memref<2x62x30xf32, #tpu.memory_space<vmem>>) attributes {dimension_semantics = [], scalar_prefetch = 0 : i64, scratch_operands = 0 : i64, tpu.core_type = #tpu.core_type<tc>} {
    %c0 = arith.constant 0 : index
    %c0_0 = arith.constant 0 : index
    %0 = vector.load %arg1[%c0, %c0_0] : memref<62x186xf32, #tpu.memory_space<vmem>>, vector<62x186xf32>
    %c0_1 = arith.constant 0 : index
    %c0_2 = arith.constant 0 : index
    %c0_3 = arith.constant 0 : index
    %1 = vector.load %arg0[%c0_1, %c0_2, %c0_3] : memref<2x186x30xf32, #tpu.memory_space<vmem>>, vector<2x186x30xf32>
    "tpu.trace_start"() <{level = 10 : i32, message = "ok,bkl->bol"}> : () -> ()
    %cst = arith.constant dense<0.000000e+00> : vector<2x30x62xf32>
    %2 = tpu.matmul %1, %0, %cst {dimension_numbers = #tpu.dot_dimension_numbers<[1], [1], [0, 2], [0], [0, 0, 0, 2, 1, 0], [], []>, precision = #tpu.contract_precision<fp32>} : vector<2x186x30xf32>, vector<62x186xf32>, vector<2x30x62xf32> -> vector<2x30x62xf32>
    %3 = tpu.transpose %2, [0, 2, 1] : vector<2x30x62xf32> -> vector<2x62x30xf32>
    "tpu.trace_stop"() : () -> ()
    %c0_4 = arith.constant 0 : index
    %c0_5 = arith.constant 0 : index
    %4 = vector.load %arg2[%c0_4, %c0_5] : memref<62x1xf32, #tpu.memory_space<vmem>>, vector<62x1xf32>
    %5 = vector.shape_cast %4 : vector<62x1xf32> to vector<1x62x1xf32>
    %6 = vector.broadcast %5 : vector<1x62x1xf32> to vector<2x62x30xf32>
    %7 = arith.addf %3, %6 : vector<2x62x30xf32>
    %c0_6 = arith.constant 0 : index
    %c0_7 = arith.constant 0 : index
    %c0_8 = arith.constant 0 : index
    %8 = vector.load %arg3[%c0_6, %c0_7, %c0_8] : memref<2x62x30xf32, #tpu.memory_space<vmem>>, vector<2x62x30xf32>
    tpu.vector_store %arg3[%c0_6, %c0_7, %c0_8], %7 {strides = array<i32>} : memref<2x62x30xf32, #tpu.memory_space<vmem>>, vector<2x62x30xf32>,
    return
  }
}

</mosaic_0001>

<llo_original>
// kernel: tpu_custom_call.1
$region0: #{tpu_custom_call.1}
  #allocation0 [shape = 'u32[]', space=smem, size = 0x4, offset = 0x4, fixed_abs, tag = 'smem constant byte address 0x4 - core index']
  #allocation1 [shape = 'u32[72,128]{1,0:T(1,128)}', space=vmem, size = 0x9000, scoped, tag = 'internal scratch']
  %s0 = inlined_call_operand.vmem [shape: f32[2,186,30], index: 0, kind: input, shape index: {}]
  %s1 = inlined_call_operand.vmem [shape: f32[62,186], index: 1, kind: input, shape index: {}]
  %s2 = inlined_call_operand.vmem [shape: f32[62,1], index: 2, kind: input, shape index: {}]
  %s3 = inlined_call_operand.vmem [shape: f32[2,62,30], index: 3, kind: output, shape index: {}]
  %s4 = sld [smem:[#allocation0]]
  $region22: #{tpu_custom_call.1} parent=0
    _
  %s6 = ssub.s32 1, %s4
  %s7 = scalar_select 0, %s6, %s4
  // Predicated region
  $region2: #{tpu_custom_call.1} parent=0 // pred_check
    _
  $region3: #{tpu_custom_call.1} parent=0 // pred_check_branch
    %9 = sbr.rel (0) target = $region5
  $region4: #{tpu_custom_call.1} parent=0 // pred_region
    _
  $region5: #{tpu_custom_call.1} parent=0 // pred_fallthru
    _
  // Predicated region
  $region6: #{tpu_custom_call.1} parent=0 // pred_check
    _
  $region7: #{tpu_custom_call.1} parent=0 // pred_check_branch
    %11 = sbr.rel (0) target = $region9
  $region8: #{tpu_custom_call.1} parent=0 // pred_region
    _
  $region9: #{tpu_custom_call.1} parent=0 // pred_fallthru
    _
  // Predicated region
  $region10: #{tpu_custom_call.1} parent=0 // pred_check
    _
  $region11: #{tpu_custom_call.1} parent=0 // pred_check_branch
    %13 = sbr.rel (0) target = $region13
  $region12: #{tpu_custom_call.1} parent=0 // pred_region
    _
  $region13: #{tpu_custom_call.1} parent=0 // pred_fallthru
    _
  %v14 = vld [vmem:[%s1] sm:$0xff]
  %v15 = vld [vmem:[%s1 + $0x8] sm:$0xff]
  %v16 = vld [vmem:[%s1 + $0x10] sm:$0xff]
  %v17 = vld [vmem:[%s1 + $0x18] sm:$0xff]
  %v18 = vld [vmem:[%s1 + $0x20] sm:$0xff]
  %v19 = vld [vmem:[%s1 + $0x28] sm:$0xff]
  %v20 = vld [vmem:[%s1 + $0x30] sm:$0xff]
  %v21 = vld [vmem:[%s1 + $0x38] sm:$0xff]
  %v22 = vld [vmem:[%s1 + $0x40] sm:$0xff]
  %v23 = vld [vmem:[%s1 + $0x48] sm:$0xff]
  %v24 = vld [vmem:[%s1 + $0x50] sm:$0xff]
  %v25 = vld [vmem:[%s1 + $0x58] sm:$0xff]
  %v26 = vld [vmem:[%s1 + $0x60] sm:$0xff]
  %v27 = vld [vmem:[%s1 + $0x68] sm:$0xff]
  %v28 = vld [vmem:[%s1 + $0x70] sm:$0x3f]
  %v29 = vld [vmem:[%s1 + $0x78] sm:$0x3f]
  %v30 = vld [vmem:[%s0] sm:$0xff]
  %v31 = vld [vmem:[%s0 + $0x8] sm:$0xff]
  %v32 = vld [vmem:[%s0 + $0x10] sm:$0xff]
  %v33 = vld [vmem:[%s0 + $0x18] sm:$0xff]
  %v34 = vld [vmem:[%s0 + $0x20] sm:$0xff]
  %v35 = vld [vmem:[%s0 + $0x28] sm:$0xff]
  %v36 = vld [vmem:[%s0 + $0x30] sm:$0xff]
  %v37 = vld [vmem:[%s0 + $0x38] sm:$0xff]
  %v38 = vld [vmem:[%s0 + $0x40] sm:$0xff]
  %v39 = vld [vmem:[%s0 + $0x48] sm:$0xff]
  %v40 = vld [vmem:[%s0 + $0x50] sm:$0xff]
  %v41 = vld [vmem:[%s0 + $0x58] sm:$0xff]
  %v42 = vld [vmem:[%s0 + $0x60] sm:$0xff]
  %v43 = vld [vmem:[%s0 + $0x68] sm:$0xff]
  %v44 = vld [vmem:[%s0 + $0x70] sm:$0xff]
  %v45 = vld [vmem:[%s0 + $0x78] sm:$0xff]
  %v46 = vld [vmem:[%s0 + $0x80] sm:$0xff]
  %v47 = vld [vmem:[%s0 + $0x88] sm:$0xff]
  %v48 = vld [vmem:[%s0 + $0x90] sm:$0xff]
  %v49 = vld [vmem:[%s0 + $0x98] sm:$0xff]
  %v50 = vld [vmem:[%s0 + $0xa0] sm:$0xff]
  %v51 = vld [vmem:[%s0 + $0xa8] sm:$0xff]
  %v52 = vld [vmem:[%s0 + $0xb0] sm:$0xff]
  %v53 = vld [vmem:[%s0 + $0xb8] sm:$0x3]
  %v54 = vld [vmem:[%s0 + $0xc0] sm:$0xff]
  %v55 = vld [vmem:[%s0 + $0xc8] sm:$0xff]
  %v56 = vld [vmem:[%s0 + $0xd0] sm:$0xff]
  %v57 = vld [vmem:[%s0 + $0xd8] sm:$0xff]
  %v58 = vld [vmem:[%s0 + $0xe0] sm:$0xff]
  %v59 = vld [vmem:[%s0 + $0xe8] sm:$0xff]
  %v60 = vld [vmem:[%s0 + $0xf0] sm:$0xff]
  %v61 = vld [vmem:[%s0 + $0xf8] sm:$0xff]
  %v62 = vld [vmem:[%s0 + $0x100] sm:$0xff]
  %v63 = vld [vmem:[%s0 + $0x108] sm:$0xff]
  %v64 = vld [vmem:[%s0 + $0x110] sm:$0xff]
  %v65 = vld [vmem:[%s0 + $0x118] sm:$0xff]
  %v66 = vld [vmem:[%s0 + $0x120] sm:$0xff]
  %v67 = vld [vmem:[%s0 + $0x128] sm:$0xff]
  %v68 = vld [vmem:[%s0 + $0x130] sm:$0xff]
  %v69 = vld [vmem:[%s0 + $0x138] sm:$0xff]
  %v70 = vld [vmem:[%s0 + $0x140] sm:$0xff]
  %v71 = vld [vmem:[%s0 + $0x148] sm:$0xff]
  %v72 = vld [vmem:[%s0 + $0x150] sm:$0xff]
  %v73 = vld [vmem:[%s0 + $0x158] sm:$0xff]
  %v74 = vld [vmem:[%s0 + $0x160] sm:$0xff]
  %v75 = vld [vmem:[%s0 + $0x168] sm:$0xff]
  %v76 = vld [vmem:[%s0 + $0x170] sm:$0xff]
  %v77 = vld [vmem:[%s0 + $0x178] sm:$0x3]
  %78 = vxpose.xlu0.b32.start [1/16] %v30, 128
  %79 = vxpose.xlu0.b32.cont [2/16] %v31, 128
  %80 = vxpose.xlu0.b32.cont [3/16] %v32, 128
  %81 = vxpose.xlu0.b32.cont [4/16] %v33, 128
  %82 = vxpose.xlu0.b32.cont [5/16] %v34, 128
  %83 = vxpose.xlu0.b32.cont [6/16] %v35, 128
  %84 = vxpose.xlu0.b32.cont [7/16] %v36, 128
  %85 = vxpose.xlu0.b32.cont [8/16] %v37, 128
  %86 = vxpose.xlu0.b32.cont [9/16] %v38, 128
  %87 = vxpose.xlu0.b32.cont [10/16] %v39, 128
  %88 = vxpose.xlu0.b32.cont [11/16] %v40, 128
  %89 = vxpose.xlu0.b32.cont [12/16] %v41, 128
  %90 = vxpose.xlu0.b32.cont [13/16] %v42, 128
  %91 = vxpose.xlu0.b32.cont [14/16] %v43, 128
  %92 = vxpose.xlu0.b32.cont [15/16] %v44, 128
  %93 = vxpose.xlu0.b32.end [16/16] %v45, 128
  %v94 = vpop.trf.xlu0
  %v95 = vpop.trf.xlu0
  %v96 = vpop.trf.xlu0
  %v97 = vpop.trf.xlu0
  %v98 = vpop.trf.xlu0
  %v99 = vpop.trf.xlu0
  %v100 = vpop.trf.xlu0
  %v101 = vpop.trf.xlu0
  %v102 = vpop.trf.xlu0
  %v103 = vpop.trf.xlu0
  %v104 = vpop.trf.xlu0
  %v105 = vpop.trf.xlu0
  %v106 = vpop.trf.xlu0
  %v107 = vpop.trf.xlu0
  %v108 = vpop.trf.xlu0
  %v109 = vpop.trf.xlu0
  %110 = vxpose.xlu0.b32.start [1/16] %v46, 128
  %111 = vxpose.xlu0.b32.cont [2/16] %v47, 128
  %112 = vxpose.xlu0.b32.cont [3/16] %v48, 128
  %113 = vxpose.xlu0.b32.cont [4/16] %v49, 128
  %114 = vxpose.xlu0.b32.cont [5/16] %v50, 128
  %115 = vxpose.xlu0.b32.cont [6/16] %v51, 128
  %116 = vxpose.xlu0.b32.cont [7/16] %v52, 128
  %117 = vxpose.xlu0.b32.cont [8/16] %v53, 128
  %118 = vxpose.xlu0.b32.cont [9/16] 0.0, 128
  %119 = vxpose.xlu0.b32.cont [10/16] 0.0, 128
  %120 = vxpose.xlu0.b32.cont [11/16] 0.0, 128
  %121 = vxpose.xlu0.b32.cont [12/16] 0.0, 128
  %122 = vxpose.xlu0.b32.cont [13/16] 0.0, 128
  %123 = vxpose.xlu0.b32.cont [14/16] 0.0, 128
  %124 = vxpose.xlu0.b32.cont [15/16] 0.0, 128
  %125 = vxpose.xlu0.b32.end [16/16] 0.0, 128
  %v126 = vpop.trf.xlu0
  %v127 = vpop.trf.xlu0
  %v128 = vpop.trf.xlu0
  %v129 = vpop.trf.xlu0
  %v130 = vpop.trf.xlu0
  %v131 = vpop.trf.xlu0
  %v132 = vpop.trf.xlu0
  %v133 = vpop.trf.xlu0
  %v134 = vpop.trf.xlu0
  %v135 = vpop.trf.xlu0
  %v136 = vpop.trf.xlu0
  %v137 = vpop.trf.xlu0
  %v138 = vpop.trf.xlu0
  %v139 = vpop.trf.xlu0
  %v140 = vpop.trf.xlu0
  %v141 = vpop.trf.xlu0
  %142 = vxpose.xlu0.b32.start [1/16] %v54, 128
  %143 = vxpose.xlu0.b32.cont [2/16] %v55, 128
  %144 = vxpose.xlu0.b32.cont [3/16] %v56, 128
  %145 = vxpose.xlu0.b32.cont [4/16] %v57, 128
  %146 = vxpose.xlu0.b32.cont [5/16] %v58, 128
  %147 = vxpose.xlu0.b32.cont [6/16] %v59, 128
  %148 = vxpose.xlu0.b32.cont [7/16] %v60, 128
  %149 = vxpose.xlu0.b32.cont [8/16] %v61, 128
  %150 = vxpose.xlu0.b32.cont [9/16] %v62, 128
  %151 = vxpose.xlu0.b32.cont [10/16] %v63, 128
  %152 = vxpose.xlu0.b32.cont [11/16] %v64, 128
  %153 = vxpose.xlu0.b32.cont [12/16] %v65, 128
  %154 = vxpose.xlu0.b32.cont [13/16] %v66, 128
  %155 = vxpose.xlu0.b32.cont [14/16] %v67, 128
  %156 = vxpose.xlu0.b32.cont [15/16] %v68, 128
  %157 = vxpose.xlu0.b32.end [16/16] %v69, 128
  %v158 = vpop.trf.xlu0
  %v159 = vpop.trf.xlu0
  %v160 = vpop.trf.xlu0
  %v161 = vpop.trf.xlu0
  %v162 = vpop.trf.xlu0
  %v163 = vpop.trf.xlu0
  %v164 = vpop.trf.xlu0
  %v165 = vpop.trf.xlu0
  %v166 = vpop.trf.xlu0
  %v167 = vpop.trf.xlu0
  %v168 = vpop.trf.xlu0
  %v169 = vpop.trf.xlu0
  %v170 = vpop.trf.xlu0
  %v171 = vpop.trf.xlu0
  %v172 = vpop.trf.xlu0
  %v173 = vpop.trf.xlu0
  %174 = vxpose.xlu0.b32.start [1/16] %v70, 128
  %175 = vxpose.xlu0.b32.cont [2/16] %v71, 128
  %176 = vxpose.xlu0.b32.cont [3/16] %v72, 128
  %177 = vxpose.xlu0.b32.cont [4/16] %v73, 128
  %178 = vxpose.xlu0.b32.cont [5/16] %v74, 128
  %179 = vxpose.xlu0.b32.cont [6/16] %v75, 128
  %180 = vxpose.xlu0.b32.cont [7/16] %v76, 128
  %181 = vxpose.xlu0.b32.cont [8/16] %v77, 128
  %182 = vxpose.xlu0.b32.cont [9/16] 0.0, 128
  %183 = vxpose.xlu0.b32.cont [10/16] 0.0, 128
  %184 = vxpose.xlu0.b32.cont [11/16] 0.0, 128
  %185 = vxpose.xlu0.b32.cont [12/16] 0.0, 128
  %186 = vxpose.xlu0.b32.cont [13/16] 0.0, 128
  %187 = vxpose.xlu0.b32.cont [14/16] 0.0, 128
  %188 = vxpose.xlu0.b32.cont [15/16] 0.0, 128
  %189 = vxpose.xlu0.b32.end [16/16] 0.0, 128
  %v190 = vpop.trf.xlu0
  %v191 = vpop.trf.xlu0
  %v192 = vpop.trf.xlu0
  %v193 = vpop.trf.xlu0
  %v194 = vpop.trf.xlu0
  %v195 = vpop.trf.xlu0
  %v196 = vpop.trf.xlu0
  %v197 = vpop.trf.xlu0
  %v198 = vpop.trf.xlu0
  %v199 = vpop.trf.xlu0
  %v200 = vpop.trf.xlu0
  %v201 = vpop.trf.xlu0
  %v202 = vpop.trf.xlu0
  %v203 = vpop.trf.xlu0
  %v204 = vpop.trf.xlu0
  %v205 = vpop.trf.xlu0
  %v222 = vrot.slane %v126, 6
  %v223 = vrot.slane %v127, 6
  %v224 = vrot.slane %v128, 6
  %v225 = vrot.slane %v129, 6
  %v226 = vrot.slane %v190, 6
  %v227 = vrot.slane %v191, 6
  %v228 = vrot.slane %v192, 6
  %v229 = vrot.slane %v193, 6
  %vm230 = vcmask 1041408
  %v231 = vsel %vm230, %v94, %v222
  %vm232 = vcmask 1043458
  %v233 = vsel %vm232, %v94, %v222
  %v234 = vrot.slane %v233, 2
  %vm235 = vcmask 1045508
  %v236 = vsel %vm235, %v94, %v222
  %v237 = vrot.slane %v236, 4
  %vm238 = vcmask 1045504
  %v239 = vsel %vm238, %v222, %v94
  %v240 = vrot.slane %v239, 6
  %v241 = vsel %vm230, %v95, %v223
  %v242 = vsel %vm232, %v95, %v223
  %v243 = vrot.slane %v242, 2
  %v244 = vsel %vm235, %v95, %v223
  %v245 = vrot.slane %v244, 4
  %v246 = vsel %vm238, %v223, %v95
  %v247 = vrot.slane %v246, 6
  %v248 = vsel %vm230, %v96, %v224
  %v249 = vsel %vm232, %v96, %v224
  %v250 = vrot.slane %v249, 2
  %v251 = vsel %vm235, %v96, %v224
  %v252 = vrot.slane %v251, 4
  %v253 = vsel %vm238, %v224, %v96
  %v254 = vrot.slane %v253, 6
  %v255 = vsel %vm230, %v97, %v225
  %v256 = vsel %vm232, %v97, %v225
  %v257 = vrot.slane %v256, 2
  %v258 = vsel %vm235, %v97, %v225
  %v259 = vrot.slane %v258, 4
  %v260 = vsel %vm230, %v158, %v226
  %v261 = vsel %vm232, %v158, %v226
  %v262 = vrot.slane %v261, 2
  %v263 = vsel %vm235, %v158, %v226
  %v264 = vrot.slane %v263, 4
  %v265 = vsel %vm238, %v226, %v158
  %v266 = vrot.slane %v265, 6
  %v267 = vsel %vm230, %v159, %v227
  %v268 = vsel %vm232, %v159, %v227
  %v269 = vrot.slane %v268, 2
  %v270 = vsel %vm235, %v159, %v227
  %v271 = vrot.slane %v270, 4
  %v272 = vsel %vm238, %v227, %v159
  %v273 = vrot.slane %v272, 6
  %v274 = vsel %vm230, %v160, %v228
  %v275 = vsel %vm232, %v160, %v228
  %v276 = vrot.slane %v275, 2
  %v277 = vsel %vm235, %v160, %v228
  %v278 = vrot.slane %v277, 4
  %v279 = vsel %vm238, %v228, %v160
  %v280 = vrot.slane %v279, 6
  %v281 = vsel %vm230, %v161, %v229
  %v282 = vsel %vm232, %v161, %v229
  %v283 = vrot.slane %v282, 2
  %v284 = vsel %vm235, %v161, %v229
  %v285 = vrot.slane %v284, 4
  %286 = vst [vmem:[#allocation1] ss:$4 sm:$0xff] %v231
  %s287 = scalar_lea.vmem [#allocation1], 1
  %288 = vst [vmem:[%s287] ss:$4 sm:$0xff] %v234
  %s289 = scalar_lea.vmem [#allocation1], 2
  %290 = vst [vmem:[%s289] ss:$4 sm:$0xff] %v237
  %s291 = scalar_lea.vmem [#allocation1], 3
  %292 = vst [vmem:[%s291] ss:$4 sm:$0xff] %v240
  %s293 = scalar_lea.vmem [#allocation1], 32
  %294 = vst [vmem:[%s293] ss:$4 sm:$0xff] %v241
  %s295 = scalar_lea.vmem [#allocation1], 33
  %296 = vst [vmem:[%s295] ss:$4 sm:$0xff] %v243
  %s297 = scalar_lea.vmem [#allocation1], 34
  %298 = vst [vmem:[%s297] ss:$4 sm:$0xff] %v245
  %s299 = scalar_lea.vmem [#allocation1], 35
  %300 = vst [vmem:[%s299] ss:$4 sm:$0xff] %v247
  %v301 = vld.sshfl [vmem:[#allocation1] sm:$0xff pattern:$0x73625140]
  %v302 = vld.sshfl [vmem:[#allocation1 + $0x8] sm:$0xff pattern:$0x73625140]
  %v303 = vld.sshfl [vmem:[#allocation1 + $0x20] sm:$0xff pattern:$0x73625140]
  %v304 = vld.sshfl [vmem:[#allocation1 + $0x28] sm:$0xff pattern:$0x73625140]
  %305 = vst [vmem:[#allocation1] ss:$4 sm:$0xff] %v248
  %306 = vst [vmem:[%s287] ss:$4 sm:$0xff] %v250
  %307 = vst [vmem:[%s289] ss:$4 sm:$0xff] %v252
  %308 = vst [vmem:[%s291] ss:$4 sm:$0xff] %v254
  %309 = vst [vmem:[%s293] ss:$4 sm:$0xff] %v255
  %310 = vst [vmem:[%s295] ss:$4 sm:$0xff] %v257
  %311 = vst [vmem:[%s297] ss:$4 sm:$0xff] %v259
  %312 = vst [vmem:[%s299] ss:$4 sm:$0xff] %v260
  %v313 = vld.sshfl [vmem:[#allocation1] sm:$0xff pattern:$0x73625140]
  %v314 = vld.sshfl [vmem:[#allocation1 + $0x8] sm:$0xff pattern:$0x73625140]
  %v315 = vld.sshfl [vmem:[#allocation1 + $0x20] sm:$0xff pattern:$0x73625140]
  %v316 = vld.sshfl [vmem:[#allocation1 + $0x28] sm:$0xff pattern:$0x73625140]
  %317 = vst [vmem:[#allocation1] ss:$4 sm:$0xff] %v262
  %318 = vst [vmem:[%s287] ss:$4 sm:$0xff] %v264
  %319 = vst [vmem:[%s289] ss:$4 sm:$0xff] %v266
  %320 = vst [vmem:[%s291] ss:$4 sm:$0xff] %v267
  %321 = vst [vmem:[%s293] ss:$4 sm:$0xff] %v269
  %322 = vst [vmem:[%s295] ss:$4 sm:$0xff] %v271
  %323 = vst [vmem:[%s297] ss:$4 sm:$0xff] %v273
  %324 = vst [vmem:[%s299] ss:$4 sm:$0xff] %v274
  %v325 = vld.sshfl [vmem:[#allocation1] sm:$0xff pattern:$0x73625140]
  %v326 = vld.sshfl [vmem:[#allocation1 + $0x8] sm:$0xff pattern:$0x73625140]
  %v327 = vld.sshfl [vmem:[#allocation1 + $0x20] sm:$0xff pattern:$0x73625140]
  %v328 = vld.sshfl [vmem:[#allocation1 + $0x28] sm:$0xff pattern:$0x73625140]
  %329 = vst [vmem:[#allocation1] ss:$4 sm:$0xff] %v276
  %330 = vst [vmem:[%s287] ss:$4 sm:$0xff] %v278
  %331 = vst [vmem:[%s289] ss:$4 sm:$0xff] %v280
  %332 = vst [vmem:[%s291] ss:$4 sm:$0xff] %v281
  %333 = vst [vmem:[%s293] ss:$4 sm:$0xff] %v283
  %334 = vst [vmem:[%s295] ss:$4 sm:$0xff] %v285
  %v335 = vld.sshfl [vmem:[#allocation1] sm:$0xff pattern:$0x73625140]
  %v336 = vld.sshfl [vmem:[#allocation1 + $0x8] sm:$0xff pattern:$0x73625140]
  %v337 = vld.sshfl [vmem:[#allocation1 + $0x20] sm:$0xff pattern:$0x73625140]
  %v338 = vld.sshfl [vmem:[#allocation1 + $0x28] sm:$0xff pattern:$0x73625140]
  %vm347 = vcmask 474112
  %v348 = vsel %vm347, %v302, 0
  %v350 = vsel %vm347, %v304, 0
  %v352 = vsel %vm347, %v314, 0
  %v354 = vsel %vm347, %v316, 0
  %v356 = vsel %vm347, %v326, 0
  %v358 = vsel %vm347, %v328, 0
  %v360 = vsel %vm347, %v336, 0
  %v362 = vsel %vm347, %v338, 0
  %v365 = vsel %vm347, %v15, 0
  %v368 = vsel %vm347, %v17, 0
  %v371 = vsel %vm347, %v19, 0
  %v374 = vsel %vm347, %v21, 0
  %v377 = vsel %vm347, %v23, 0
  %v380 = vsel %vm347, %v25, 0
  %v383 = vsel %vm347, %v27, 0
  %v386 = vsel %vm347, %v29, 0
  %388 = vmatpush.xpose.msra.mxu0 0.0
  %389 = vmatpush.xpose.msra.mxu0 0.0
  %390 = vmatpush.xpose.msra.mxu0 0.0
  %391 = vmatpush.xpose.msra.mxu0 0.0
  %392 = vmatpush.xpose.msra.mxu0 0.0
  %393 = vmatpush.xpose.msra.mxu0 0.0
  %394 = vmatpush.xpose.msra.mxu0 0.0
  %395 = vmatpush.xpose.msra.mxu0 0.0
  %v396 = vand.u32 %v28, 4294901760
  %397 = vmatpush.xpose.msra.mxu0 %v396
  %v398 = vand.u32 %v26, 4294901760
  %399 = vmatpush.xpose.msra.mxu0 %v398
  %v400 = vand.u32 %v24, 4294901760
  %401 = vmatpush.xpose.msra.mxu0 %v400
  %v402 = vand.u32 %v22, 4294901760
  %403 = vmatpush.xpose.msra.mxu0 %v402
  %v404 = vand.u32 %v20, 4294901760
  %405 = vmatpush.xpose.msra.mxu0 %v404
  %v406 = vand.u32 %v18, 4294901760
  %407 = vmatpush.xpose.msra.mxu0 %v406
  %v408 = vand.u32 %v16, 4294901760
  %409 = vmatpush.xpose.msra.mxu0 %v408
  %v410 = vand.u32 %v14, 4294901760
  %411 = vmatpush.xpose.msra.mxu0 %v410
  %v412 = vand.u32 %v301, 4294901760
  %v413 = vsub.f32 %v301, %v412
  %v414 = vand.u32 %v413, 4294901760
  %v415 = vsub.f32 %v413, %v414
  %v416 = vand.u32 %v415, 4294901760
  %417 = vmatmul.f32.gmra.mxu0 %v416
  %v418 = vpop.f32.mrf.mxu0
  %v419 = vadd.f32 0.0, %v418
  %v420 = vand.u32 %v303, 4294901760
  %v421 = vsub.f32 %v303, %v420
  %v422 = vand.u32 %v421, 4294901760
  %v423 = vsub.f32 %v421, %v422
  %v424 = vand.u32 %v423, 4294901760
  %425 = vmatmul.f32.gmra.mxu0 %v424
  %v426 = vpop.f32.mrf.mxu0
  %v427 = vadd.f32 0.0, %v426
  %v428 = vand.u32 %v313, 4294901760
  %v429 = vsub.f32 %v313, %v428
  %v430 = vand.u32 %v429, 4294901760
  %v431 = vsub.f32 %v429, %v430
  %v432 = vand.u32 %v431, 4294901760
  %433 = vmatmul.f32.gmra.mxu0 %v432
  %v434 = vpop.f32.mrf.mxu0
  %v435 = vadd.f32 0.0, %v434
  %v436 = vand.u32 %v315, 4294901760
  %v437 = vsub.f32 %v315, %v436
  %v438 = vand.u32 %v437, 4294901760
  %v439 = vsub.f32 %v437, %v438
  %v440 = vand.u32 %v439, 4294901760
  %441 = vmatmul.f32.gmra.mxu0 %v440
  %v442 = vpop.f32.mrf.mxu0
  %v443 = vadd.f32 0.0, %v442
  %v444 = vand.u32 %v325, 4294901760
  %v445 = vsub.f32 %v325, %v444
  %v446 = vand.u32 %v445, 4294901760
  %v447 = vsub.f32 %v445, %v446
  %v448 = vand.u32 %v447, 4294901760
  %449 = vmatmul.f32.gmra.mxu0 %v448
  %v450 = vpop.f32.mrf.mxu0
  %v451 = vadd.f32 0.0, %v450
  %v452 = vand.u32 %v327, 4294901760
  %v453 = vsub.f32 %v327, %v452
  %v454 = vand.u32 %v453, 4294901760
  %v455 = vsub.f32 %v453, %v454
  %v456 = vand.u32 %v455, 4294901760
  %457 = vmatmul.f32.gmra.mxu0 %v456
  %v458 = vpop.f32.mrf.mxu0
  %v459 = vadd.f32 0.0, %v458
  %v460 = vand.u32 %v335, 4294901760
  %v461 = vsub.f32 %v335, %v460
  %v462 = vand.u32 %v461, 4294901760
  %v463 = vsub.f32 %v461, %v462
  %v464 = vand.u32 %v463, 4294901760
  %465 = vmatmul.f32.gmra.mxu0 %v464
  %v466 = vpop.f32.mrf.mxu0
  %v467 = vadd.f32 0.0, %v466
  %v468 = vand.u32 %v337, 4294901760
  %v469 = vsub.f32 %v337, %v468
  %v470 = vand.u32 %v469, 4294901760
  %v471 = vsub.f32 %v469, %v470
  %v472 = vand.u32 %v471, 4294901760
  %473 = vmatmul.f32.gmra.mxu0 %v472
  %v474 = vpop.f32.mrf.mxu0
  %v475 = vadd.f32 0.0, %v474
  %476 = vdwg.mxu0
  %477 = vmatpush.xpose.msra.mxu0 0.0
  %478 = vmatpush.xpose.msra.mxu0 0.0
  %479 = vmatpush.xpose.msra.mxu0 0.0
  %480 = vmatpush.xpose.msra.mxu0 0.0
  %481 = vmatpush.xpose.msra.mxu0 0.0
  %482 = vmatpush.xpose.msra.mxu0 0.0
  %483 = vmatpush.xpose.msra.mxu0 0.0
  %484 = vmatpush.xpose.msra.mxu0 0.0
  %v485 = vand.u32 %v28, 4294901760
  %v486 = vsub.f32 %v28, %v485
  %v487 = vand.u32 %v486, 4294901760
  %v488 = vsub.f32 %v486, %v487
  %v489 = vand.u32 %v488, 4294901760
  %490 = vmatpush.xpose.msra.mxu0 %v489
  %v491 = vand.u32 %v26, 4294901760
  %v492 = vsub.f32 %v26, %v491
  %v493 = vand.u32 %v492, 4294901760
  %v494 = vsub.f32 %v492, %v493
  %v495 = vand.u32 %v494, 4294901760
  %496 = vmatpush.xpose.msra.mxu0 %v495
  %v497 = vand.u32 %v24, 4294901760
  %v498 = vsub.f32 %v24, %v497
  %v499 = vand.u32 %v498, 4294901760
  %v500 = vsub.f32 %v498, %v499
  %v501 = vand.u32 %v500, 4294901760
  %502 = vmatpush.xpose.msra.mxu0 %v501
  %v503 = vand.u32 %v22, 4294901760
  %v504 = vsub.f32 %v22, %v503
  %v505 = vand.u32 %v504, 4294901760
  %v506 = vsub.f32 %v504, %v505
  %v507 = vand.u32 %v506, 4294901760
  %508 = vmatpush.xpose.msra.mxu0 %v507
  %v509 = vand.u32 %v20, 4294901760
  %v510 = vsub.f32 %v20, %v509
  %v511 = vand.u32 %v510, 4294901760
  %v512 = vsub.f32 %v510, %v511
  %v513 = vand.u32 %v512, 4294901760
  %514 = vmatpush.xpose.msra.mxu0 %v513
  %v515 = vand.u32 %v18, 4294901760
  %v516 = vsub.f32 %v18, %v515
  %v517 = vand.u32 %v516, 4294901760
  %v518 = vsub.f32 %v516, %v517
  %v519 = vand.u32 %v518, 4294901760
  %520 = vmatpush.xpose.msra.mxu0 %v519
  %v521 = vand.u32 %v16, 4294901760
  %v522 = vsub.f32 %v16, %v521
  %v523 = vand.u32 %v522, 4294901760
  %v524 = vsub.f32 %v522, %v523
  %v525 = vand.u32 %v524, 4294901760
  %526 = vmatpush.xpose.msra.mxu0 %v525
  %v527 = vand.u32 %v14, 4294901760
  %v528 = vsub.f32 %v14, %v527
  %v529 = vand.u32 %v528, 4294901760
  %v530 = vsub.f32 %v528, %v529
  %v531 = vand.u32 %v530, 4294901760
  %532 = vmatpush.xpose.msra.mxu0 %v531
  %v533 = vand.u32 %v301, 4294901760
  %534 = vmatmul.f32.gmra.mxu0 %v533
  %v535 = vpop.f32.mrf.mxu0
  %v536 = vadd.f32 %v419, %v535
  %v537 = vand.u32 %v303, 4294901760
  %538 = vmatmul.f32.gmra.mxu0 %v537
  %v539 = vpop.f32.mrf.mxu0
  %v540 = vadd.f32 %v427, %v539
  %v541 = vand.u32 %v313, 4294901760
  %542 = vmatmul.f32.gmra.mxu0 %v541
  %v543 = vpop.f32.mrf.mxu0
  %v544 = vadd.f32 %v435, %v543
  %v545 = vand.u32 %v315, 4294901760
  %546 = vmatmul.f32.gmra.mxu0 %v545
  %v547 = vpop.f32.mrf.mxu0
  %v548 = vadd.f32 %v443, %v547
  %v549 = vand.u32 %v325, 4294901760
  %550 = vmatmul.f32.gmra.mxu0 %v549
  %v551 = vpop.f32.mrf.mxu0
  %v552 = vadd.f32 %v451, %v551
  %v553 = vand.u32 %v327, 4294901760
  %554 = vmatmul.f32.gmra.mxu0 %v553
  %v555 = vpop.f32.mrf.mxu0
  %v556 = vadd.f32 %v459, %v555
  %v557 = vand.u32 %v335, 4294901760
  %558 = vmatmul.f32.gmra.mxu0 %v557
  %v559 = vpop.f32.mrf.mxu0
  %v560 = vadd.f32 %v467, %v559
  %v561 = vand.u32 %v337, 4294901760
  %562 = vmatmul.f32.gmra.mxu0 %v561
  %v563 = vpop.f32.mrf.mxu0
  %v564 = vadd.f32 %v475, %v563
  %565 = vdwg.mxu0
  %566 = vmatpush.xpose.msra.mxu0 0.0
  %567 = vmatpush.xpose.msra.mxu0 0.0
  %568 = vmatpush.xpose.msra.mxu0 0.0
  %569 = vmatpush.xpose.msra.mxu0 0.0
  %570 = vmatpush.xpose.msra.mxu0 0.0
  %571 = vmatpush.xpose.msra.mxu0 0.0
  %572 = vmatpush.xpose.msra.mxu0 0.0
  %573 = vmatpush.xpose.msra.mxu0 0.0
  %v574 = vand.u32 %v28, 4294901760
  %v575 = vsub.f32 %v28, %v574
  %576 = vmatpush.xpose.msra.mxu0 %v575
  %v577 = vand.u32 %v26, 4294901760
  %v578 = vsub.f32 %v26, %v577
  %579 = vmatpush.xpose.msra.mxu0 %v578
  %v580 = vand.u32 %v24, 4294901760
  %v581 = vsub.f32 %v24, %v580
  %582 = vmatpush.xpose.msra.mxu0 %v581
  %v583 = vand.u32 %v22, 4294901760
  %v584 = vsub.f32 %v22, %v583
  %585 = vmatpush.xpose.msra.mxu0 %v584
  %v586 = vand.u32 %v20, 4294901760
  %v587 = vsub.f32 %v20, %v586
  %588 = vmatpush.xpose.msra.mxu0 %v587
  %v589 = vand.u32 %v18, 4294901760
  %v590 = vsub.f32 %v18, %v589
  %591 = vmatpush.xpose.msra.mxu0 %v590
  %v592 = vand.u32 %v16, 4294901760
  %v593 = vsub.f32 %v16, %v592
  %594 = vmatpush.xpose.msra.mxu0 %v593
  %v595 = vand.u32 %v14, 4294901760
  %v596 = vsub.f32 %v14, %v595
  %597 = vmatpush.xpose.msra.mxu0 %v596
  %v598 = vand.u32 %v301, 4294901760
  %v599 = vsub.f32 %v301, %v598
  %600 = vmatmul.f32.gmra.mxu0 %v599
  %v601 = vpop.f32.mrf.mxu0
  %v602 = vadd.f32 %v536, %v601
  %v603 = vand.u32 %v303, 4294901760
  %v604 = vsub.f32 %v303, %v603
  %605 = vmatmul.f32.gmra.mxu0 %v604
  %v606 = vpop.f32.mrf.mxu0
  %v607 = vadd.f32 %v540, %v606
  %v608 = vand.u32 %v313, 4294901760
  %v609 = vsub.f32 %v313, %v608
  %610 = vmatmul.f32.gmra.mxu0 %v609
  %v611 = vpop.f32.mrf.mxu0
  %v612 = vadd.f32 %v544, %v611
  %v613 = vand.u32 %v315, 4294901760
  %v614 = vsub.f32 %v315, %v613
  %615 = vmatmul.f32.gmra.mxu0 %v614
  %v616 = vpop.f32.mrf.mxu0
  %v617 = vadd.f32 %v548, %v616
  %v618 = vand.u32 %v325, 4294901760
  %v619 = vsub.f32 %v325, %v618
  %620 = vmatmul.f32.gmra.mxu0 %v619
  %v621 = vpop.f32.mrf.mxu0
  %v622 = vadd.f32 %v552, %v621
  %v623 = vand.u32 %v327, 4294901760
  %v624 = vsub.f32 %v327, %v623
  %625 = vmatmul.f32.gmra.mxu0 %v624
  %v626 = vpop.f32.mrf.mxu0
  %v627 = vadd.f32 %v556, %v626
  %v628 = vand.u32 %v335, 4294901760
  %v629 = vsub.f32 %v335, %v628
  %630 = vmatmul.f32.gmra.mxu0 %v629
  %v631 = vpop.f32.mrf.mxu0
  %v632 = vadd.f32 %v560, %v631
  %v633 = vand.u32 %v337, 4294901760
  %v634 = vsub.f32 %v337, %v633
  %635 = vmatmul.f32.gmra.mxu0 %v634
  %v636 = vpop.f32.mrf.mxu0
  %v637 = vadd.f32 %v564, %v636
  %638 = vdwg.mxu0
  %639 = vmatpush.xpose.msra.mxu0 0.0
  %640 = vmatpush.xpose.msra.mxu0 0.0
  %641 = vmatpush.xpose.msra.mxu0 0.0
  %642 = vmatpush.xpose.msra.mxu0 0.0
  %643 = vmatpush.xpose.msra.mxu0 0.0
  %644 = vmatpush.xpose.msra.mxu0 0.0
  %645 = vmatpush.xpose.msra.mxu0 0.0
  %646 = vmatpush.xpose.msra.mxu0 0.0
  %v647 = vand.u32 %v28, 4294901760
  %648 = vmatpush.xpose.msra.mxu0 %v647
  %v649 = vand.u32 %v26, 4294901760
  %650 = vmatpush.xpose.msra.mxu0 %v649
  %v651 = vand.u32 %v24, 4294901760
  %652 = vmatpush.xpose.msra.mxu0 %v651
  %v653 = vand.u32 %v22, 4294901760
  %654 = vmatpush.xpose.msra.mxu0 %v653
  %v655 = vand.u32 %v20, 4294901760
  %656 = vmatpush.xpose.msra.mxu0 %v655
  %v657 = vand.u32 %v18, 4294901760
  %658 = vmatpush.xpose.msra.mxu0 %v657
  %v659 = vand.u32 %v16, 4294901760
  %660 = vmatpush.xpose.msra.mxu0 %v659
  %v661 = vand.u32 %v14, 4294901760
  %662 = vmatpush.xpose.msra.mxu0 %v661
  %v663 = vand.u32 %v301, 4294901760
  %v664 = vsub.f32 %v301, %v663
  %v665 = vand.u32 %v664, 4294901760
  %666 = vmatmul.f32.gmra.mxu0 %v665
  %v667 = vpop.f32.mrf.mxu0
  %v668 = vadd.f32 %v602, %v667
  %v669 = vand.u32 %v303, 4294901760
  %v670 = vsub.f32 %v303, %v669
  %v671 = vand.u32 %v670, 4294901760
  %672 = vmatmul.f32.gmra.mxu0 %v671
  %v673 = vpop.f32.mrf.mxu0
  %v674 = vadd.f32 %v607, %v673
  %v675 = vand.u32 %v313, 4294901760
  %v676 = vsub.f32 %v313, %v675
  %v677 = vand.u32 %v676, 4294901760
  %678 = vmatmul.f32.gmra.mxu0 %v677
  %v679 = vpop.f32.mrf.mxu0
  %v680 = vadd.f32 %v612, %v679
  %v681 = vand.u32 %v315, 4294901760
  %v682 = vsub.f32 %v315, %v681
  %v683 = vand.u32 %v682, 4294901760
  %684 = vmatmul.f32.gmra.mxu0 %v683
  %v685 = vpop.f32.mrf.mxu0
  %v686 = vadd.f32 %v617, %v685
  %v687 = vand.u32 %v325, 4294901760
  %v688 = vsub.f32 %v325, %v687
  %v689 = vand.u32 %v688, 4294901760
  %690 = vmatmul.f32.gmra.mxu0 %v689
  %v691 = vpop.f32.mrf.mxu0
  %v692 = vadd.f32 %v622, %v691
  %v693 = vand.u32 %v327, 4294901760
  %v694 = vsub.f32 %v327, %v693
  %v695 = vand.u32 %v694, 4294901760
  %696 = vmatmul.f32.gmra.mxu0 %v695
  %v697 = vpop.f32.mrf.mxu0
  %v698 = vadd.f32 %v627, %v697
  %v699 = vand.u32 %v335, 4294901760
  %v700 = vsub.f32 %v335, %v699
  %v701 = vand.u32 %v700, 4294901760
  %702 = vmatmul.f32.gmra.mxu0 %v701
  %v703 = vpop.f32.mrf.mxu0
  %v704 = vadd.f32 %v632, %v703
  %v705 = vand.u32 %v337, 4294901760
  %v706 = vsub.f32 %v337, %v705
  %v707 = vand.u32 %v706, 4294901760
  %708 = vmatmul.f32.gmra.mxu0 %v707
  %v709 = vpop.f32.mrf.mxu0
  %v710 = vadd.f32 %v637, %v709
  %711 = vdwg.mxu0
  %712 = vmatpush.xpose.msra.mxu0 0.0
  %713 = vmatpush.xpose.msra.mxu0 0.0
  %714 = vmatpush.xpose.msra.mxu0 0.0
  %715 = vmatpush.xpose.msra.mxu0 0.0
  %716 = vmatpush.xpose.msra.mxu0 0.0
  %717 = vmatpush.xpose.msra.mxu0 0.0
  %718 = vmatpush.xpose.msra.mxu0 0.0
  %719 = vmatpush.xpose.msra.mxu0 0.0
  %v720 = vand.u32 %v28, 4294901760
  %v721 = vsub.f32 %v28, %v720
  %v722 = vand.u32 %v721, 4294901760
  %723 = vmatpush.xpose.msra.mxu0 %v722
  %v724 = vand.u32 %v26, 4294901760
  %v725 = vsub.f32 %v26, %v724
  %v726 = vand.u32 %v725, 4294901760
  %727 = vmatpush.xpose.msra.mxu0 %v726
  %v728 = vand.u32 %v24, 4294901760
  %v729 = vsub.f32 %v24, %v728
  %v730 = vand.u32 %v729, 4294901760
  %731 = vmatpush.xpose.msra.mxu0 %v730
  %v732 = vand.u32 %v22, 4294901760
  %v733 = vsub.f32 %v22, %v732
  %v734 = vand.u32 %v733, 4294901760
  %735 = vmatpush.xpose.msra.mxu0 %v734
  %v736 = vand.u32 %v20, 4294901760
  %v737 = vsub.f32 %v20, %v736
  %v738 = vand.u32 %v737, 4294901760
  %739 = vmatpush.xpose.msra.mxu0 %v738
  %v740 = vand.u32 %v18, 4294901760
  %v741 = vsub.f32 %v18, %v740
  %v742 = vand.u32 %v741, 4294901760
  %743 = vmatpush.xpose.msra.mxu0 %v742
  %v744 = vand.u32 %v16, 4294901760
  %v745 = vsub.f32 %v16, %v744
  %v746 = vand.u32 %v745, 4294901760
  %747 = vmatpush.xpose.msra.mxu0 %v746
  %v748 = vand.u32 %v14, 4294901760
  %v749 = vsub.f32 %v14, %v748
  %v750 = vand.u32 %v749, 4294901760
  %751 = vmatpush.xpose.msra.mxu0 %v750
  %v752 = vand.u32 %v301, 4294901760
  %753 = vmatmul.f32.gmra.mxu0 %v752
  %v754 = vpop.f32.mrf.mxu0
  %v755 = vadd.f32 %v668, %v754
  %v756 = vand.u32 %v303, 4294901760
  %757 = vmatmul.f32.gmra.mxu0 %v756
  %v758 = vpop.f32.mrf.mxu0
  %v759 = vadd.f32 %v674, %v758
  %v760 = vand.u32 %v313, 4294901760
  %761 = vmatmul.f32.gmra.mxu0 %v760
  %v762 = vpop.f32.mrf.mxu0
  %v763 = vadd.f32 %v680, %v762
  %v764 = vand.u32 %v315, 4294901760
  %765 = vmatmul.f32.gmra.mxu0 %v764
  %v766 = vpop.f32.mrf.mxu0
  %v767 = vadd.f32 %v686, %v766
  %v768 = vand.u32 %v325, 4294901760
  %769 = vmatmul.f32.gmra.mxu0 %v768
  %v770 = vpop.f32.mrf.mxu0
  %v771 = vadd.f32 %v692, %v770
  %v772 = vand.u32 %v327, 4294901760
  %773 = vmatmul.f32.gmra.mxu0 %v772
  %v774 = vpop.f32.mrf.mxu0
  %v775 = vadd.f32 %v698, %v774
  %v776 = vand.u32 %v335, 4294901760
  %777 = vmatmul.f32.gmra.mxu0 %v776
  %v778 = vpop.f32.mrf.mxu0
  %v779 = vadd.f32 %v704, %v778
  %v780 = vand.u32 %v337, 4294901760
  %781 = vmatmul.f32.gmra.mxu0 %v780
  %v782 = vpop.f32.mrf.mxu0
  %v783 = vadd.f32 %v710, %v782
  %784 = vdwg.mxu0
  %785 = vmatpush.xpose.msra.mxu0 0.0
  %786 = vmatpush.xpose.msra.mxu0 0.0
  %787 = vmatpush.xpose.msra.mxu0 0.0
  %788 = vmatpush.xpose.msra.mxu0 0.0
  %789 = vmatpush.xpose.msra.mxu0 0.0
  %790 = vmatpush.xpose.msra.mxu0 0.0
  %791 = vmatpush.xpose.msra.mxu0 0.0
  %792 = vmatpush.xpose.msra.mxu0 0.0
  %v793 = vand.u32 %v28, 4294901760
  %794 = vmatpush.xpose.msra.mxu0 %v793
  %v795 = vand.u32 %v26, 4294901760
  %796 = vmatpush.xpose.msra.mxu0 %v795
  %v797 = vand.u32 %v24, 4294901760
  %798 = vmatpush.xpose.msra.mxu0 %v797
  %v799 = vand.u32 %v22, 4294901760
  %800 = vmatpush.xpose.msra.mxu0 %v799
  %v801 = vand.u32 %v20, 4294901760
  %802 = vmatpush.xpose.msra.mxu0 %v801
  %v803 = vand.u32 %v18, 4294901760
  %804 = vmatpush.xpose.msra.mxu0 %v803
  %v805 = vand.u32 %v16, 4294901760
  %806 = vmatpush.xpose.msra.mxu0 %v805
  %v807 = vand.u32 %v14, 4294901760
  %808 = vmatpush.xpose.msra.mxu0 %v807
  %v809 = vand.u32 %v301, 4294901760
  %810 = vmatmul.f32.gmra.mxu0 %v809
  %v811 = vpop.f32.mrf.mxu0
  %v812 = vadd.f32 %v755, %v811
  %v813 = vand.u32 %v303, 4294901760
  %814 = vmatmul.f32.gmra.mxu0 %v813
  %v815 = vpop.f32.mrf.mxu0
  %v816 = vadd.f32 %v759, %v815
  %v817 = vand.u32 %v313, 4294901760
  %818 = vmatmul.f32.gmra.mxu0 %v817
  %v819 = vpop.f32.mrf.mxu0
  %v820 = vadd.f32 %v763, %v819
  %v821 = vand.u32 %v315, 4294901760
  %822 = vmatmul.f32.gmra.mxu0 %v821
  %v823 = vpop.f32.mrf.mxu0
  %v824 = vadd.f32 %v767, %v823
  %v825 = vand.u32 %v325, 4294901760
  %826 = vmatmul.f32.gmra.mxu0 %v825
  %v827 = vpop.f32.mrf.mxu0
  %v828 = vadd.f32 %v771, %v827
  %v829 = vand.u32 %v327, 4294901760
  %830 = vmatmul.f32.gmra.mxu0 %v829
  %v831 = vpop.f32.mrf.mxu0
  %v832 = vadd.f32 %v775, %v831
  %v833 = vand.u32 %v335, 4294901760
  %834 = vmatmul.f32.gmra.mxu0 %v833
  %v835 = vpop.f32.mrf.mxu0
  %v836 = vadd.f32 %v779, %v835
  %v837 = vand.u32 %v337, 4294901760
  %838 = vmatmul.f32.gmra.mxu0 %v837
  %v839 = vpop.f32.mrf.mxu0
  %v840 = vadd.f32 %v783, %v839
  %841 = vdwg.mxu0
  %842 = vmatpush.xpose.msra.mxu0 0.0
  %843 = vmatpush.xpose.msra.mxu0 0.0
  %844 = vmatpush.xpose.msra.mxu0 0.0
  %845 = vmatpush.xpose.msra.mxu0 0.0
  %846 = vmatpush.xpose.msra.mxu0 0.0
  %847 = vmatpush.xpose.msra.mxu0 0.0
  %848 = vmatpush.xpose.msra.mxu0 0.0
  %849 = vmatpush.xpose.msra.mxu0 0.0
  %v850 = vand.u32 %v386, 4294901760
  %851 = vmatpush.xpose.msra.mxu0 %v850
  %v852 = vand.u32 %v383, 4294901760
  %853 = vmatpush.xpose.msra.mxu0 %v852
  %v854 = vand.u32 %v380, 4294901760
  %855 = vmatpush.xpose.msra.mxu0 %v854
  %v856 = vand.u32 %v377, 4294901760
  %857 = vmatpush.xpose.msra.mxu0 %v856
  %v858 = vand.u32 %v374, 4294901760
  %859 = vmatpush.xpose.msra.mxu0 %v858
  %v860 = vand.u32 %v371, 4294901760
  %861 = vmatpush.xpose.msra.mxu0 %v860
  %v862 = vand.u32 %v368, 4294901760
  %863 = vmatpush.xpose.msra.mxu0 %v862
  %v864 = vand.u32 %v365, 4294901760
  %865 = vmatpush.xpose.msra.mxu0 %v864
  %v866 = vand.u32 %v348, 4294901760
  %v867 = vsub.f32 %v348, %v866
  %v868 = vand.u32 %v867, 4294901760
  %v869 = vsub.f32 %v867, %v868
  %v870 = vand.u32 %v869, 4294901760
  %871 = vmatmul.f32.gmra.mxu0 %v870
  %v872 = vpop.f32.mrf.mxu0
  %v873 = vadd.f32 %v812, %v872
  %v874 = vand.u32 %v350, 4294901760
  %v875 = vsub.f32 %v350, %v874
  %v876 = vand.u32 %v875, 4294901760
  %v877 = vsub.f32 %v875, %v876
  %v878 = vand.u32 %v877, 4294901760
  %879 = vmatmul.f32.gmra.mxu0 %v878
  %v880 = vpop.f32.mrf.mxu0
  %v881 = vadd.f32 %v816, %v880
  %v882 = vand.u32 %v352, 4294901760
  %v883 = vsub.f32 %v352, %v882
  %v884 = vand.u32 %v883, 4294901760
  %v885 = vsub.f32 %v883, %v884
  %v886 = vand.u32 %v885, 4294901760
  %887 = vmatmul.f32.gmra.mxu0 %v886
  %v888 = vpop.f32.mrf.mxu0
  %v889 = vadd.f32 %v820, %v888
  %v890 = vand.u32 %v354, 4294901760
  %v891 = vsub.f32 %v354, %v890
  %v892 = vand.u32 %v891, 4294901760
  %v893 = vsub.f32 %v891, %v892
  %v894 = vand.u32 %v893, 4294901760
  %895 = vmatmul.f32.gmra.mxu0 %v894
  %v896 = vpop.f32.mrf.mxu0
  %v897 = vadd.f32 %v824, %v896
  %v898 = vand.u32 %v356, 4294901760
  %v899 = vsub.f32 %v356, %v898
  %v900 = vand.u32 %v899, 4294901760
  %v901 = vsub.f32 %v899, %v900
  %v902 = vand.u32 %v901, 4294901760
  %903 = vmatmul.f32.gmra.mxu0 %v902
  %v904 = vpop.f32.mrf.mxu0
  %v905 = vadd.f32 %v828, %v904
  %v906 = vand.u32 %v358, 4294901760
  %v907 = vsub.f32 %v358, %v906
  %v908 = vand.u32 %v907, 4294901760
  %v909 = vsub.f32 %v907, %v908
  %v910 = vand.u32 %v909, 4294901760
  %911 = vmatmul.f32.gmra.mxu0 %v910
  %v912 = vpop.f32.mrf.mxu0
  %v913 = vadd.f32 %v832, %v912
  %v914 = vand.u32 %v360, 4294901760
  %v915 = vsub.f32 %v360, %v914
  %v916 = vand.u32 %v915, 4294901760
  %v917 = vsub.f32 %v915, %v916
  %v918 = vand.u32 %v917, 4294901760
  %919 = vmatmul.f32.gmra.mxu0 %v918
  %v920 = vpop.f32.mrf.mxu0
  %v921 = vadd.f32 %v836, %v920
  %v922 = vand.u32 %v362, 4294901760
  %v923 = vsub.f32 %v362, %v922
  %v924 = vand.u32 %v923, 4294901760
  %v925 = vsub.f32 %v923, %v924
  %v926 = vand.u32 %v925, 4294901760
  %927 = vmatmul.f32.gmra.mxu0 %v926
  %v928 = vpop.f32.mrf.mxu0
  %v929 = vadd.f32 %v840, %v928
  %930 = vdwg.mxu0
  %931 = vmatpush.xpose.msra.mxu0 0.0
  %932 = vmatpush.xpose.msra.mxu0 0.0
  %933 = vmatpush.xpose.msra.mxu0 0.0
  %934 = vmatpush.xpose.msra.mxu0 0.0
  %935 = vmatpush.xpose.msra.mxu0 0.0
  %936 = vmatpush.xpose.msra.mxu0 0.0
  %937 = vmatpush.xpose.msra.mxu0 0.0
  %938 = vmatpush.xpose.msra.mxu0 0.0
  %v939 = vand.u32 %v386, 4294901760
  %v940 = vsub.f32 %v386, %v939
  %v941 = vand.u32 %v940, 4294901760
  %v942 = vsub.f32 %v940, %v941
  %v943 = vand.u32 %v942, 4294901760
  %944 = vmatpush.xpose.msra.mxu0 %v943
  %v945 = vand.u32 %v383, 4294901760
  %v946 = vsub.f32 %v383, %v945
  %v947 = vand.u32 %v946, 4294901760
  %v948 = vsub.f32 %v946, %v947
  %v949 = vand.u32 %v948, 4294901760
  %950 = vmatpush.xpose.msra.mxu0 %v949
  %v951 = vand.u32 %v380, 4294901760
  %v952 = vsub.f32 %v380, %v951
  %v953 = vand.u32 %v952, 4294901760
  %v954 = vsub.f32 %v952, %v953
  %v955 = vand.u32 %v954, 4294901760
  %956 = vmatpush.xpose.msra.mxu0 %v955
  %v957 = vand.u32 %v377, 4294901760
  %v958 = vsub.f32 %v377, %v957
  %v959 = vand.u32 %v958, 4294901760
  %v960 = vsub.f32 %v958, %v959
  %v961 = vand.u32 %v960, 4294901760
  %962 = vmatpush.xpose.msra.mxu0 %v961
  %v963 = vand.u32 %v374, 4294901760
  %v964 = vsub.f32 %v374, %v963
  %v965 = vand.u32 %v964, 4294901760
  %v966 = vsub.f32 %v964, %v965
  %v967 = vand.u32 %v966, 4294901760
  %968 = vmatpush.xpose.msra.mxu0 %v967
  %v969 = vand.u32 %v371, 4294901760
  %v970 = vsub.f32 %v371, %v969
  %v971 = vand.u32 %v970, 4294901760
  %v972 = vsub.f32 %v970, %v971
  %v973 = vand.u32 %v972, 4294901760
  %974 = vmatpush.xpose.msra.mxu0 %v973
  %v975 = vand.u32 %v368, 4294901760
  %v976 = vsub.f32 %v368, %v975
  %v977 = vand.u32 %v976, 4294901760
  %v978 = vsub.f32 %v976, %v977
  %v979 = vand.u32 %v978, 4294901760
  %980 = vmatpush.xpose.msra.mxu0 %v979
  %v981 = vand.u32 %v365, 4294901760
  %v982 = vsub.f32 %v365, %v981
  %v983 = vand.u32 %v982, 4294901760
  %v984 = vsub.f32 %v982, %v983
  %v985 = vand.u32 %v984, 4294901760
  %986 = vmatpush.xpose.msra.mxu0 %v985
  %v987 = vand.u32 %v348, 4294901760
  %988 = vmatmul.f32.gmra.mxu0 %v987
  %v989 = vpop.f32.mrf.mxu0
  %v990 = vadd.f32 %v873, %v989
  %v991 = vand.u32 %v350, 4294901760
  %992 = vmatmul.f32.gmra.mxu0 %v991
  %v993 = vpop.f32.mrf.mxu0
  %v994 = vadd.f32 %v881, %v993
  %v995 = vand.u32 %v352, 4294901760
  %996 = vmatmul.f32.gmra.mxu0 %v995
  %v997 = vpop.f32.mrf.mxu0
  %v998 = vadd.f32 %v889, %v997
  %v999 = vand.u32 %v354, 4294901760
  %1000 = vmatmul.f32.gmra.mxu0 %v999
  %v1001 = vpop.f32.mrf.mxu0
  %v1002 = vadd.f32 %v897, %v1001
  %v1003 = vand.u32 %v356, 4294901760
  %1004 = vmatmul.f32.gmra.mxu0 %v1003
  %v1005 = vpop.f32.mrf.mxu0
  %v1006 = vadd.f32 %v905, %v1005
  %v1007 = vand.u32 %v358, 4294901760
  %1008 = vmatmul.f32.gmra.mxu0 %v1007
  %v1009 = vpop.f32.mrf.mxu0
  %v1010 = vadd.f32 %v913, %v1009
  %v1011 = vand.u32 %v360, 4294901760
  %1012 = vmatmul.f32.gmra.mxu0 %v1011
  %v1013 = vpop.f32.mrf.mxu0
  %v1014 = vadd.f32 %v921, %v1013
  %v1015 = vand.u32 %v362, 4294901760
  %1016 = vmatmul.f32.gmra.mxu0 %v1015
  %v1017 = vpop.f32.mrf.mxu0
  %v1018 = vadd.f32 %v929, %v1017
  %1019 = vdwg.mxu0
  %1020 = vmatpush.xpose.msra.mxu0 0.0
  %1021 = vmatpush.xpose.msra.mxu0 0.0
  %1022 = vmatpush.xpose.msra.mxu0 0.0
  %1023 = vmatpush.xpose.msra.mxu0 0.0
  %1024 = vmatpush.xpose.msra.mxu0 0.0
  %1025 = vmatpush.xpose.msra.mxu0 0.0
  %1026 = vmatpush.xpose.msra.mxu0 0.0
  %1027 = vmatpush.xpose.msra.mxu0 0.0
  %v1028 = vand.u32 %v386, 4294901760
  %v1029 = vsub.f32 %v386, %v1028
  %1030 = vmatpush.xpose.msra.mxu0 %v1029
  %v1031 = vand.u32 %v383, 4294901760
  %v1032 = vsub.f32 %v383, %v1031
  %1033 = vmatpush.xpose.msra.mxu0 %v1032
  %v1034 = vand.u32 %v380, 4294901760
  %v1035 = vsub.f32 %v380, %v1034
  %1036 = vmatpush.xpose.msra.mxu0 %v1035
  %v1037 = vand.u32 %v377, 4294901760
  %v1038 = vsub.f32 %v377, %v1037
  %1039 = vmatpush.xpose.msra.mxu0 %v1038
  %v1040 = vand.u32 %v374, 4294901760
  %v1041 = vsub.f32 %v374, %v1040
  %1042 = vmatpush.xpose.msra.mxu0 %v1041
  %v1043 = vand.u32 %v371, 4294901760
  %v1044 = vsub.f32 %v371, %v1043
  %1045 = vmatpush.xpose.msra.mxu0 %v1044
  %v1046 = vand.u32 %v368, 4294901760
  %v1047 = vsub.f32 %v368, %v1046
  %1048 = vmatpush.xpose.msra.mxu0 %v1047
  %v1049 = vand.u32 %v365, 4294901760
  %v1050 = vsub.f32 %v365, %v1049
  %1051 = vmatpush.xpose.msra.mxu0 %v1050
  %v1052 = vand.u32 %v348, 4294901760
  %v1053 = vsub.f32 %v348, %v1052
  %1054 = vmatmul.f32.gmra.mxu0 %v1053
  %v1055 = vpop.f32.mrf.mxu0
  %v1056 = vadd.f32 %v990, %v1055
  %v1057 = vand.u32 %v350, 4294901760
  %v1058 = vsub.f32 %v350, %v1057
  %1059 = vmatmul.f32.gmra.mxu0 %v1058
  %v1060 = vpop.f32.mrf.mxu0
  %v1061 = vadd.f32 %v994, %v1060
  %v1062 = vand.u32 %v352, 4294901760
  %v1063 = vsub.f32 %v352, %v1062
  %1064 = vmatmul.f32.gmra.mxu0 %v1063
  %v1065 = vpop.f32.mrf.mxu0
  %v1066 = vadd.f32 %v998, %v1065
  %v1067 = vand.u32 %v354, 4294901760
  %v1068 = vsub.f32 %v354, %v1067
  %1069 = vmatmul.f32.gmra.mxu0 %v1068
  %v1070 = vpop.f32.mrf.mxu0
  %v1071 = vadd.f32 %v1002, %v1070
  %v1072 = vand.u32 %v356, 4294901760
  %v1073 = vsub.f32 %v356, %v1072
  %1074 = vmatmul.f32.gmra.mxu0 %v1073
  %v1075 = vpop.f32.mrf.mxu0
  %v1076 = vadd.f32 %v1006, %v1075
  %v1077 = vand.u32 %v358, 4294901760
  %v1078 = vsub.f32 %v358, %v1077
  %1079 = vmatmul.f32.gmra.mxu0 %v1078
  %v1080 = vpop.f32.mrf.mxu0
  %v1081 = vadd.f32 %v1010, %v1080
  %v1082 = vand.u32 %v360, 4294901760
  %v1083 = vsub.f32 %v360, %v1082
  %1084 = vmatmul.f32.gmra.mxu0 %v1083
  %v1085 = vpop.f32.mrf.mxu0
  %v1086 = vadd.f32 %v1014, %v1085
  %v1087 = vand.u32 %v362, 4294901760
  %v1088 = vsub.f32 %v362, %v1087
  %1089 = vmatmul.f32.gmra.mxu0 %v1088
  %v1090 = vpop.f32.mrf.mxu0
  %v1091 = vadd.f32 %v1018, %v1090
  %1092 = vdwg.mxu0
  %1093 = vmatpush.xpose.msra.mxu0 0.0
  %1094 = vmatpush.xpose.msra.mxu0 0.0
  %1095 = vmatpush.xpose.msra.mxu0 0.0
  %1096 = vmatpush.xpose.msra.mxu0 0.0
  %1097 = vmatpush.xpose.msra.mxu0 0.0
  %1098 = vmatpush.xpose.msra.mxu0 0.0
  %1099 = vmatpush.xpose.msra.mxu0 0.0
  %1100 = vmatpush.xpose.msra.mxu0 0.0
  %v1101 = vand.u32 %v386, 4294901760
  %1102 = vmatpush.xpose.msra.mxu0 %v1101
  %v1103 = vand.u32 %v383, 4294901760
  %1104 = vmatpush.xpose.msra.mxu0 %v1103
  %v1105 = vand.u32 %v380, 4294901760
  %1106 = vmatpush.xpose.msra.mxu0 %v1105
  %v1107 = vand.u32 %v377, 4294901760
  %1108 = vmatpush.xpose.msra.mxu0 %v1107
  %v1109 = vand.u32 %v374, 4294901760
  %1110 = vmatpush.xpose.msra.mxu0 %v1109
  %v1111 = vand.u32 %v371, 4294901760
  %1112 = vmatpush.xpose.msra.mxu0 %v1111
  %v1113 = vand.u32 %v368, 4294901760
  %1114 = vmatpush.xpose.msra.mxu0 %v1113
  %v1115 = vand.u32 %v365, 4294901760
  %1116 = vmatpush.xpose.msra.mxu0 %v1115
  %v1117 = vand.u32 %v348, 4294901760
  %v1118 = vsub.f32 %v348, %v1117
  %v1119 = vand.u32 %v1118, 4294901760
  %1120 = vmatmul.f32.gmra.mxu0 %v1119
  %v1121 = vpop.f32.mrf.mxu0
  %v1122 = vadd.f32 %v1056, %v1121
  %v1123 = vand.u32 %v350, 4294901760
  %v1124 = vsub.f32 %v350, %v1123
  %v1125 = vand.u32 %v1124, 4294901760
  %1126 = vmatmul.f32.gmra.mxu0 %v1125
  %v1127 = vpop.f32.mrf.mxu0
  %v1128 = vadd.f32 %v1061, %v1127
  %v1129 = vand.u32 %v352, 4294901760
  %v1130 = vsub.f32 %v352, %v1129
  %v1131 = vand.u32 %v1130, 4294901760
  %1132 = vmatmul.f32.gmra.mxu0 %v1131
  %v1133 = vpop.f32.mrf.mxu0
  %v1134 = vadd.f32 %v1066, %v1133
  %v1135 = vand.u32 %v354, 4294901760
  %v1136 = vsub.f32 %v354, %v1135
  %v1137 = vand.u32 %v1136, 4294901760
  %1138 = vmatmul.f32.gmra.mxu0 %v1137
  %v1139 = vpop.f32.mrf.mxu0
  %v1140 = vadd.f32 %v1071, %v1139
  %v1141 = vand.u32 %v356, 4294901760
  %v1142 = vsub.f32 %v356, %v1141
  %v1143 = vand.u32 %v1142, 4294901760
  %1144 = vmatmul.f32.gmra.mxu0 %v1143
  %v1145 = vpop.f32.mrf.mxu0
  %v1146 = vadd.f32 %v1076, %v1145
  %v1147 = vand.u32 %v358, 4294901760
  %v1148 = vsub.f32 %v358, %v1147
  %v1149 = vand.u32 %v1148, 4294901760
  %1150 = vmatmul.f32.gmra.mxu0 %v1149
  %v1151 = vpop.f32.mrf.mxu0
  %v1152 = vadd.f32 %v1081, %v1151
  %v1153 = vand.u32 %v360, 4294901760
  %v1154 = vsub.f32 %v360, %v1153
  %v1155 = vand.u32 %v1154, 4294901760
  %1156 = vmatmul.f32.gmra.mxu0 %v1155
  %v1157 = vpop.f32.mrf.mxu0
  %v1158 = vadd.f32 %v1086, %v1157
  %v1159 = vand.u32 %v362, 4294901760
  %v1160 = vsub.f32 %v362, %v1159
  %v1161 = vand.u32 %v1160, 4294901760
  %1162 = vmatmul.f32.gmra.mxu0 %v1161
  %v1163 = vpop.f32.mrf.mxu0
  %v1164 = vadd.f32 %v1091, %v1163
  %1165 = vdwg.mxu0
  %1166 = vmatpush.xpose.msra.mxu0 0.0
  %1167 = vmatpush.xpose.msra.mxu0 0.0
  %1168 = vmatpush.xpose.msra.mxu0 0.0
  %1169 = vmatpush.xpose.msra.mxu0 0.0
  %1170 = vmatpush.xpose.msra.mxu0 0.0
  %1171 = vmatpush.xpose.msra.mxu0 0.0
  %1172 = vmatpush.xpose.msra.mxu0 0.0
  %1173 = vmatpush.xpose.msra.mxu0 0.0
  %v1174 = vand.u32 %v386, 4294901760
  %v1175 = vsub.f32 %v386, %v1174
  %v1176 = vand.u32 %v1175, 4294901760
  %1177 = vmatpush.xpose.msra.mxu0 %v1176
  %v1178 = vand.u32 %v383, 4294901760
  %v1179 = vsub.f32 %v383, %v1178
  %v1180 = vand.u32 %v1179, 4294901760
  %1181 = vmatpush.xpose.msra.mxu0 %v1180
  %v1182 = vand.u32 %v380, 4294901760
  %v1183 = vsub.f32 %v380, %v1182
  %v1184 = vand.u32 %v1183, 4294901760
  %1185 = vmatpush.xpose.msra.mxu0 %v1184
  %v1186 = vand.u32 %v377, 4294901760
  %v1187 = vsub.f32 %v377, %v1186
  %v1188 = vand.u32 %v1187, 4294901760
  %1189 = vmatpush.xpose.msra.mxu0 %v1188
  %v1190 = vand.u32 %v374, 4294901760
  %v1191 = vsub.f32 %v374, %v1190
  %v1192 = vand.u32 %v1191, 4294901760
  %1193 = vmatpush.xpose.msra.mxu0 %v1192
  %v1194 = vand.u32 %v371, 4294901760
  %v1195 = vsub.f32 %v371, %v1194
  %v1196 = vand.u32 %v1195, 4294901760
  %1197 = vmatpush.xpose.msra.mxu0 %v1196
  %v1198 = vand.u32 %v368, 4294901760
  %v1199 = vsub.f32 %v368, %v1198
  %v1200 = vand.u32 %v1199, 4294901760
  %1201 = vmatpush.xpose.msra.mxu0 %v1200
  %v1202 = vand.u32 %v365, 4294901760
  %v1203 = vsub.f32 %v365, %v1202
  %v1204 = vand.u32 %v1203, 4294901760
  %1205 = vmatpush.xpose.msra.mxu0 %v1204
  %v1206 = vand.u32 %v348, 4294901760
  %1207 = vmatmul.f32.gmra.mxu0 %v1206
  %v1208 = vpop.f32.mrf.mxu0
  %v1209 = vadd.f32 %v1122, %v1208
  %v1210 = vand.u32 %v350, 4294901760
  %1211 = vmatmul.f32.gmra.mxu0 %v1210
  %v1212 = vpop.f32.mrf.mxu0
  %v1213 = vadd.f32 %v1128, %v1212
  %v1214 = vand.u32 %v352, 4294901760
  %1215 = vmatmul.f32.gmra.mxu0 %v1214
  %v1216 = vpop.f32.mrf.mxu0
  %v1217 = vadd.f32 %v1134, %v1216
  %v1218 = vand.u32 %v354, 4294901760
  %1219 = vmatmul.f32.gmra.mxu0 %v1218
  %v1220 = vpop.f32.mrf.mxu0
  %v1221 = vadd.f32 %v1140, %v1220
  %v1222 = vand.u32 %v356, 4294901760
  %1223 = vmatmul.f32.gmra.mxu0 %v1222
  %v1224 = vpop.f32.mrf.mxu0
  %v1225 = vadd.f32 %v1146, %v1224
  %v1226 = vand.u32 %v358, 4294901760
  %1227 = vmatmul.f32.gmra.mxu0 %v1226
  %v1228 = vpop.f32.mrf.mxu0
  %v1229 = vadd.f32 %v1152, %v1228
  %v1230 = vand.u32 %v360, 4294901760
  %1231 = vmatmul.f32.gmra.mxu0 %v1230
  %v1232 = vpop.f32.mrf.mxu0
  %v1233 = vadd.f32 %v1158, %v1232
  %v1234 = vand.u32 %v362, 4294901760
  %1235 = vmatmul.f32.gmra.mxu0 %v1234
  %v1236 = vpop.f32.mrf.mxu0
  %v1237 = vadd.f32 %v1164, %v1236
  %1238 = vdwg.mxu0
  %1239 = vmatpush.xpose.msra.mxu0 0.0
  %1240 = vmatpush.xpose.msra.mxu0 0.0
  %1241 = vmatpush.xpose.msra.mxu0 0.0
  %1242 = vmatpush.xpose.msra.mxu0 0.0
  %1243 = vmatpush.xpose.msra.mxu0 0.0
  %1244 = vmatpush.xpose.msra.mxu0 0.0
  %1245 = vmatpush.xpose.msra.mxu0 0.0
  %1246 = vmatpush.xpose.msra.mxu0 0.0
  %v1247 = vand.u32 %v386, 4294901760
  %1248 = vmatpush.xpose.msra.mxu0 %v1247
  %v1249 = vand.u32 %v383, 4294901760
  %1250 = vmatpush.xpose.msra.mxu0 %v1249
  %v1251 = vand.u32 %v380, 4294901760
  %1252 = vmatpush.xpose.msra.mxu0 %v1251
  %v1253 = vand.u32 %v377, 4294901760
  %1254 = vmatpush.xpose.msra.mxu0 %v1253
  %v1255 = vand.u32 %v374, 4294901760
  %1256 = vmatpush.xpose.msra.mxu0 %v1255
  %v1257 = vand.u32 %v371, 4294901760
  %1258 = vmatpush.xpose.msra.mxu0 %v1257
  %v1259 = vand.u32 %v368, 4294901760
  %1260 = vmatpush.xpose.msra.mxu0 %v1259
  %v1261 = vand.u32 %v365, 4294901760
  %1262 = vmatpush.xpose.msra.mxu0 %v1261
  %v1263 = vand.u32 %v348, 4294901760
  %1264 = vmatmul.f32.gmra.mxu0 %v1263
  %v1265 = vpop.f32.mrf.mxu0
  %v1266 = vadd.f32 %v1209, %v1265
  %v1267 = vand.u32 %v350, 4294901760
  %1268 = vmatmul.f32.gmra.mxu0 %v1267
  %v1269 = vpop.f32.mrf.mxu0
  %v1270 = vadd.f32 %v1213, %v1269
  %v1271 = vand.u32 %v352, 4294901760
  %1272 = vmatmul.f32.gmra.mxu0 %v1271
  %v1273 = vpop.f32.mrf.mxu0
  %v1274 = vadd.f32 %v1217, %v1273
  %v1275 = vand.u32 %v354, 4294901760
  %1276 = vmatmul.f32.gmra.mxu0 %v1275
  %v1277 = vpop.f32.mrf.mxu0
  %v1278 = vadd.f32 %v1221, %v1277
  %v1279 = vand.u32 %v356, 4294901760
  %1280 = vmatmul.f32.gmra.mxu0 %v1279
  %v1281 = vpop.f32.mrf.mxu0
  %v1282 = vadd.f32 %v1225, %v1281
  %v1283 = vand.u32 %v358, 4294901760
  %1284 = vmatmul.f32.gmra.mxu0 %v1283
  %v1285 = vpop.f32.mrf.mxu0
  %v1286 = vadd.f32 %v1229, %v1285
  %v1287 = vand.u32 %v360, 4294901760
  %1288 = vmatmul.f32.gmra.mxu0 %v1287
  %v1289 = vpop.f32.mrf.mxu0
  %v1290 = vadd.f32 %v1233, %v1289
  %v1291 = vand.u32 %v362, 4294901760
  %1292 = vmatmul.f32.gmra.mxu0 %v1291
  %v1293 = vpop.f32.mrf.mxu0
  %v1294 = vadd.f32 %v1237, %v1293
  %1295 = vdwg.mxu0
  %v1304 = vrot.slane %v1266, 2
  %v1305 = vrot.slane %v1266, 4
  %v1306 = vrot.slane %v1266, 6
  %v1307 = vrot.slane %v1270, 2
  %v1308 = vrot.slane %v1270, 4
  %v1309 = vrot.slane %v1270, 6
  %v1310 = vrot.slane %v1274, 2
  %v1311 = vrot.slane %v1274, 4
  %v1312 = vrot.slane %v1274, 6
  %v1313 = vrot.slane %v1278, 2
  %v1314 = vrot.slane %v1278, 4
  %v1315 = vrot.slane %v1278, 6
  %v1316 = vrot.slane %v1282, 2
  %v1317 = vrot.slane %v1282, 4
  %v1318 = vrot.slane %v1282, 6
  %v1319 = vrot.slane %v1286, 2
  %v1320 = vrot.slane %v1286, 4
  %v1321 = vrot.slane %v1286, 6
  %v1322 = vrot.slane %v1290, 2
  %v1323 = vrot.slane %v1290, 4
  %v1324 = vrot.slane %v1290, 6
  %v1325 = vrot.slane %v1294, 2
  %1326 = vst [vmem:[#allocation1] ss:$4 sm:$0xff] %v1266
  %s1327 = scalar_lea.vmem [#allocation1], 1
  %1328 = vst [vmem:[%s1327] ss:$4 sm:$0xff] %v1304
  %s1329 = scalar_lea.vmem [#allocation1], 2
  %1330 = vst [vmem:[%s1329] ss:$4 sm:$0xff] %v1305
  %s1331 = scalar_lea.vmem [#allocation1], 3
  %1332 = vst [vmem:[%s1331] ss:$4 sm:$0xff] %v1306
  %s1333 = scalar_lea.vmem [#allocation1], 32
  %1334 = vst [vmem:[%s1333] ss:$4 sm:$0xff] %v1270
  %s1335 = scalar_lea.vmem [#allocation1], 33
  %1336 = vst [vmem:[%s1335] ss:$4 sm:$0xff] %v1307
  %s1337 = scalar_lea.vmem [#allocation1], 34
  %1338 = vst [vmem:[%s1337] ss:$4 sm:$0xff] %v1308
  %s1339 = scalar_lea.vmem [#allocation1], 35
  %1340 = vst [vmem:[%s1339] ss:$4 sm:$0xff] %v1309
  %v1341 = vld.sshfl [vmem:[#allocation1] sm:$0xff pattern:$0x73625140]
  %v1342 = vld.sshfl [vmem:[#allocation1 + $0x20] sm:$0xff pattern:$0x73625140]
  %1343 = vst [vmem:[#allocation1] ss:$4 sm:$0xff] %v1274
  %1344 = vst [vmem:[%s1327] ss:$4 sm:$0xff] %v1310
  %1345 = vst [vmem:[%s1329] ss:$4 sm:$0xff] %v1311
  %1346 = vst [vmem:[%s1331] ss:$4 sm:$0xff] %v1312
  %1347 = vst [vmem:[%s1333] ss:$4 sm:$0xff] %v1278
  %1348 = vst [vmem:[%s1335] ss:$4 sm:$0xff] %v1313
  %1349 = vst [vmem:[%s1337] ss:$4 sm:$0xff] %v1314
  %v1350 = vld.sshfl [vmem:[#allocation1] sm:$0xff pattern:$0x73625140]
  %v1351 = vld.sshfl [vmem:[#allocation1 + $0x20] sm:$0xff pattern:$0x73625140]
  %1352 = vst [vmem:[#allocation1] ss:$4 sm:$0xff] %v1315
  %1353 = vst [vmem:[%s1327] ss:$4 sm:$0xff] %v1282
  %1354 = vst [vmem:[%s1329] ss:$4 sm:$0xff] %v1316
  %1355 = vst [vmem:[%s1331] ss:$4 sm:$0xff] %v1317
  %1356 = vst [vmem:[%s1333] ss:$4 sm:$0xff] %v1318
  %1357 = vst [vmem:[%s1335] ss:$4 sm:$0xff] %v1286
  %1358 = vst [vmem:[%s1337] ss:$4 sm:$0xff] %v1319
  %1359 = vst [vmem:[%s1339] ss:$4 sm:$0xff] %v1320
  %v1360 = vld.sshfl [vmem:[#allocation1] sm:$0xff pattern:$0x73625140]
  %v1361 = vld.sshfl [vmem:[#allocation1 + $0x20] sm:$0xff pattern:$0x73625140]
  %1362 = vst [vmem:[#allocation1] ss:$4 sm:$0xff] %v1321
  %1363 = vst [vmem:[%s1327] ss:$4 sm:$0xff] %v1290
  %1364 = vst [vmem:[%s1329] ss:$4 sm:$0xff] %v1322
  %1365 = vst [vmem:[%s1331] ss:$4 sm:$0xff] %v1323
  %1366 = vst [vmem:[%s1333] ss:$4 sm:$0xff] %v1324
  %1367 = vst [vmem:[%s1335] ss:$4 sm:$0xff] %v1294
  %1368 = vst [vmem:[%s1337] ss:$4 sm:$0xff] %v1325
  %v1369 = vld.sshfl [vmem:[#allocation1] sm:$0xff pattern:$0x73625140]
  %v1370 = vld.sshfl [vmem:[#allocation1 + $0x20] sm:$0xff pattern:$0x73625140]
  %1379 = vxpose.xlu0.b32.start [1/16] %v1341, 128
  %1380 = vxpose.xlu0.b32.cont [2/16] %v1342, 128
  %1381 = vxpose.xlu0.b32.cont [3/16] %v1350, 128
  %1382 = vxpose.xlu0.b32.cont [4/16] %v1351, 128
  %1383 = vxpose.xlu0.b32.cont [5/16] 0.0, 128
  %1384 = vxpose.xlu0.b32.cont [6/16] 0.0, 128
  %1385 = vxpose.xlu0.b32.cont [7/16] 0.0, 128
  %1386 = vxpose.xlu0.b32.cont [8/16] 0.0, 128
  %1387 = vxpose.xlu0.b32.cont [9/16] 0.0, 128
  %1388 = vxpose.xlu0.b32.cont [10/16] 0.0, 128
  %1389 = vxpose.xlu0.b32.cont [11/16] 0.0, 128
  %1390 = vxpose.xlu0.b32.cont [12/16] 0.0, 128
  %1391 = vxpose.xlu0.b32.cont [13/16] 0.0, 128
  %1392 = vxpose.xlu0.b32.cont [14/16] 0.0, 128
  %1393 = vxpose.xlu0.b32.cont [15/16] 0.0, 128
  %1394 = vxpose.xlu0.b32.end [16/16] 0.0, 128
  %v1395 = vpop.trf.xlu0
  %v1396 = vpop.trf.xlu0
  %v1397 = vpop.trf.xlu0
  %v1398 = vpop.trf.xlu0
  %v1399 = vpop.trf.xlu0
  %v1400 = vpop.trf.xlu0
  %v1401 = vpop.trf.xlu0
  %v1402 = vpop.trf.xlu0
  %v1403 = vpop.trf.xlu0
  %v1404 = vpop.trf.xlu0
  %v1405 = vpop.trf.xlu0
  %v1406 = vpop.trf.xlu0
  %v1407 = vpop.trf.xlu0
  %v1408 = vpop.trf.xlu0
  %v1409 = vpop.trf.xlu0
  %v1410 = vpop.trf.xlu0
  %1411 = vxpose.xlu0.b32.start [1/16] %v1360, 128
  %1412 = vxpose.xlu0.b32.cont [2/16] %v1361, 128
  %1413 = vxpose.xlu0.b32.cont [3/16] %v1369, 128
  %1414 = vxpose.xlu0.b32.cont [4/16] %v1370, 128
  %1415 = vxpose.xlu0.b32.cont [5/16] 0.0, 128
  %1416 = vxpose.xlu0.b32.cont [6/16] 0.0, 128
  %1417 = vxpose.xlu0.b32.cont [7/16] 0.0, 128
  %1418 = vxpose.xlu0.b32.cont [8/16] 0.0, 128
  %1419 = vxpose.xlu0.b32.cont [9/16] 0.0, 128
  %1420 = vxpose.xlu0.b32.cont [10/16] 0.0, 128
  %1421 = vxpose.xlu0.b32.cont [11/16] 0.0, 128
  %1422 = vxpose.xlu0.b32.cont [12/16] 0.0, 128
  %1423 = vxpose.xlu0.b32.cont [13/16] 0.0, 128
  %1424 = vxpose.xlu0.b32.cont [14/16] 0.0, 128
  %1425 = vxpose.xlu0.b32.cont [15/16] 0.0, 128
  %1426 = vxpose.xlu0.b32.end [16/16] 0.0, 128
  %v1427 = vpop.trf.xlu0
  %v1428 = vpop.trf.xlu0
  %v1429 = vpop.trf.xlu0
  %v1430 = vpop.trf.xlu0
  %v1431 = vpop.trf.xlu0
  %v1432 = vpop.trf.xlu0
  %v1433 = vpop.trf.xlu0
  %v1434 = vpop.trf.xlu0
  %v1435 = vpop.trf.xlu0
  %v1436 = vpop.trf.xlu0
  %v1437 = vpop.trf.xlu0
  %v1438 = vpop.trf.xlu0
  %v1439 = vpop.trf.xlu0
  %v1440 = vpop.trf.xlu0
  %v1441 = vpop.trf.xlu0
  %v1442 = vpop.trf.xlu0
  %v1443 = vld [vmem:[%s2] sm:$0xff]
  %v1444 = vld [vmem:[%s2 + $0x8] sm:$0xff]
  %v1445 = vld [vmem:[%s2 + $0x10] sm:$0xff]
  %v1446 = vld [vmem:[%s2 + $0x18] sm:$0xff]
  %v1447 = vld [vmem:[%s2 + $0x20] sm:$0xff]
  %v1448 = vld [vmem:[%s2 + $0x28] sm:$0xff]
  %v1449 = vld [vmem:[%s2 + $0x30] sm:$0xff]
  %v1450 = vld [vmem:[%s2 + $0x38] sm:$0x3f]
  %1452 = vset.pattern.permute.xlu0 0
  %1453 = vperm.xlu0 %1452, %v1443
  %v1454 = vpop.permute.xlu0 %1453
  %1457 = vset.pattern.permute.xlu0 0
  %1458 = vperm.xlu0 %1457, %v1444
  %v1459 = vpop.permute.xlu0 %1458
  %1462 = vset.pattern.permute.xlu0 0
  %1463 = vperm.xlu0 %1462, %v1445
  %v1464 = vpop.permute.xlu0 %1463
  %1467 = vset.pattern.permute.xlu0 0
  %1468 = vperm.xlu0 %1467, %v1446
  %v1469 = vpop.permute.xlu0 %1468
  %1472 = vset.pattern.permute.xlu0 0
  %1473 = vperm.xlu0 %1472, %v1447
  %v1474 = vpop.permute.xlu0 %1473
  %1477 = vset.pattern.permute.xlu0 0
  %1478 = vperm.xlu0 %1477, %v1448
  %v1479 = vpop.permute.xlu0 %1478
  %1482 = vset.pattern.permute.xlu0 0
  %1483 = vperm.xlu0 %1482, %v1449
  %v1484 = vpop.permute.xlu0 %1483
  %1487 = vset.pattern.permute.xlu0 0
  %1488 = vperm.xlu0 %1487, %v1450
  %v1489 = vpop.permute.xlu0 %1488
  %v1491 = vadd.f32 %v1395, %v1454
  %v1492 = vadd.f32 %v1396, %v1459
  %v1493 = vadd.f32 %v1397, %v1464
  %v1494 = vadd.f32 %v1398, %v1469
  %v1495 = vadd.f32 %v1399, %v1474
  %v1496 = vadd.f32 %v1400, %v1479
  %v1497 = vadd.f32 %v1401, %v1484
  %v1498 = vadd.f32 %v1402, %v1489
  %v1499 = vadd.f32 %v1427, %v1454
  %v1500 = vadd.f32 %v1428, %v1459
  %v1501 = vadd.f32 %v1429, %v1464
  %v1502 = vadd.f32 %v1430, %v1469
  %v1503 = vadd.f32 %v1431, %v1474
  %v1504 = vadd.f32 %v1432, %v1479
  %v1505 = vadd.f32 %v1433, %v1484
  %v1506 = vadd.f32 %v1434, %v1489
  %vm1507 = vcmask 244736
  %1508 = vst.msk [vmem:[%s3] sm:$0xff] %vm1507, %v1491
  %1509 = vst.msk [vmem:[%s3 + $0x8] sm:$0xff] %vm1507, %v1492
  %1510 = vst.msk [vmem:[%s3 + $0x10] sm:$0xff] %vm1507, %v1493
  %1511 = vst.msk [vmem:[%s3 + $0x18] sm:$0xff] %vm1507, %v1494
  %1512 = vst.msk [vmem:[%s3 + $0x20] sm:$0xff] %vm1507, %v1495
  %1513 = vst.msk [vmem:[%s3 + $0x28] sm:$0xff] %vm1507, %v1496
  %1514 = vst.msk [vmem:[%s3 + $0x30] sm:$0xff] %vm1507, %v1497
  %vm1515 = vcmask 242688
  %1516 = vst.msk [vmem:[%s3 + $0x38] sm:$0x3f] %vm1515, %v1498
  %1517 = vst.msk [vmem:[%s3 + $0x40] sm:$0xff] %vm1507, %v1499
  %1518 = vst.msk [vmem:[%s3 + $0x48] sm:$0xff] %vm1507, %v1500
  %1519 = vst.msk [vmem:[%s3 + $0x50] sm:$0xff] %vm1507, %v1501
  %1520 = vst.msk [vmem:[%s3 + $0x58] sm:$0xff] %vm1507, %v1502
  %1521 = vst.msk [vmem:[%s3 + $0x60] sm:$0xff] %vm1507, %v1503
  %1522 = vst.msk [vmem:[%s3 + $0x68] sm:$0xff] %vm1507, %v1504
  %1523 = vst.msk [vmem:[%s3 + $0x70] sm:$0xff] %vm1507, %v1505
  %1524 = vst.msk [vmem:[%s3 + $0x78] sm:$0x3f] %vm1515, %v1506
  // Predicated region
  $region14: #{tpu_custom_call.1} parent=0 // pred_check
    _
  $region15: #{tpu_custom_call.1} parent=0 // pred_check_branch
    %1526 = sbr.rel (0) target = $region17
  $region16: #{tpu_custom_call.1} parent=0 // pred_region
    _
  $region17: #{tpu_custom_call.1} parent=0 // pred_fallthru
    _
  // Predicated region
  $region18: #{tpu_custom_call.1} parent=0 // pred_check
    _
  $region19: #{tpu_custom_call.1} parent=0 // pred_check_branch
    %1528 = sbr.rel (0) target = $region21
  $region20: #{tpu_custom_call.1} parent=0 // pred_region
    _
  $region21: #{tpu_custom_call.1} parent=0 // pred_fallthru
    _

</llo_original>
